<compile_context>
chip_gen: v5e
topology: v5e:2x2
jax: 0.10.0
libtpu: 0.0.40
codegen_flags: <defaults>
</compile_context>

<pallas_src>
import functools

import jax
import jax.numpy as jnp
from jax.experimental import pallas as pl
from jax.experimental.pallas import tpu as pltpu


def spatial_attention_kernel(x_ref, w_ref, xmask_ref, o_ref, *, K, pad, H, W):
    """One batch block per grid step, fully lane-dense.

    x_ref     : VMEM (Bb, C, H*W)   input activations (spatial flattened on lanes)
    w_ref     : SMEM (2*K*K,)       conv taps, layout [in_ch, ky, kx]
    xmask_ref : VMEM (K, H*W)       0/1 source-column masks, one per kx offset
    o_ref     : VMEM (Bb, 1, H*W)   sigmoid(conv(feat))
    """
    Bb, C, HW = x_ref.shape

    # ---- channel pooling (single strip-mined reduction over C) ----
    xf = x_ref[...].astype(jnp.float32)          # (Bb, C, HW)
    avg = jnp.mean(xf, axis=1)                   # (Bb, HW)
    mx = jnp.max(xf, axis=1)                     # (Bb, HW)

    # ---- KxK "same" conv in flattened space -------------------------------
    # output[f] += w[c,ky,kx] * feat_c[f + (ky-pad)*W + (kx-pad)]  (zero outside)
    # Row (top/bottom) padding is handled by the zero-filled shift; column
    # (left/right) padding by the precomputed per-kx source mask.
    max_s = pad * W + pad
    zpad = jnp.zeros((Bb, max_s), jnp.float32)

    def shift(v, s):                             # u[:, f] = v[:, f+s], zero fill
        if s == 0:
            return v
        if s > 0:
            return jnp.concatenate([v[:, s:], zpad[:, :s]], axis=1)
        return jnp.concatenate([zpad[:, :(-s)], v[:, :s]], axis=1)

    acc = jnp.zeros((Bb, HW), jnp.float32)
    for kx in range(K):
        dx = kx - pad
        m = xmask_ref[kx:kx + 1, :]              # (1, HW) 0/1 mask for this dx
        planes = (avg * m, mx * m)               # pre-masked sources, reused over ky
        for c in range(2):
            pm = planes[c]
            base = c * K * K
            for ky in range(K):
                s = (ky - pad) * W + dx
                tap = w_ref[base + ky * K + kx]  # scalar from SMEM
                acc = acc + tap * shift(pm, s)

    o_ref[:, 0, :] = jax.nn.sigmoid(acc).astype(o_ref.dtype)


def _pick_batch_block(B, bytes_per_batch, vmem_target=4 << 20):
    """Largest divisor of B whose double-buffered input block stays under the VMEM
    budget, keeping >= 2 grid steps when possible (pipelining + both v7x cores)."""
    best = 1
    for d in range(1, B + 1):
        if B % d != 0:
            continue
        if 2 * d * bytes_per_batch > vmem_target:
            continue
        if d > 1 and B // d < 2:
            continue
        best = d
    return best


def spatial_attention(x, w, *, kernel_size=7):
    """x: (B, C, H, W) NCHW; w: (1, 2, K, K) PyTorch Conv2d weight (bias=False).
    Returns (B, 1, H, W), matching the PyTorch module."""
    assert kernel_size in (3, 7), "kernel size must be 3 or 7"
    pad = 3 if kernel_size == 7 else 1
    K = kernel_size
    B, C, H, W = x.shape
    assert w.shape == (1, 2, K, K)
    assert H > pad and W > pad
    HW = H * W

    x2 = x.reshape(B, C, HW)                                  # free view, lane-dense
    w_flat = w.reshape(2 * K * K).astype(jnp.float32)         # [in_ch, ky, kx]

    # Per-kx source-column masks: column x' contributes at lane-shift dx only if the
    # shifted position stays within the same image row.
    col = jnp.tile(jnp.arange(W, dtype=jnp.int32), H)         # (HW,)
    xmask = jnp.stack(
        [((col >= max(0, kx - pad)) & (col < min(W, W + kx - pad))).astype(jnp.float32)
         for kx in range(K)], axis=0)                         # (K, HW)

    bytes_per_batch = C * HW * x.dtype.itemsize
    Bb = _pick_batch_block(B, bytes_per_batch)
    grid = (B // Bb,)

    kernel = functools.partial(spatial_attention_kernel, K=K, pad=pad, H=H, W=W)
    cost = pl.CostEstimate(
        flops=2 * B * C * HW + 4 * B * HW * K * K,
        transcendentals=B * HW,
        bytes_accessed=(B * C * HW + B * HW) * x.dtype.itemsize
        + 4 * (2 * K * K + K * HW),
    )

    out = pl.pallas_call(
        kernel,
        out_shape=jax.ShapeDtypeStruct((B, 1, HW), x.dtype),
        grid=grid,
        in_specs=[
            pl.BlockSpec((Bb, C, HW), lambda b: (b, 0, 0)),
            pl.BlockSpec(memory_space=pltpu.MemorySpace.SMEM),   # conv taps as scalars
            pl.BlockSpec((K, HW), lambda b: (0, 0)),             # column masks
        ],
        out_specs=pl.BlockSpec((Bb, 1, HW), lambda b: (b, 0, 0)),
        compiler_params=pltpu.CompilerParams(
            dimension_semantics=("parallel",)),
        cost_estimate=cost,
    )(x2, w_flat, xmask)
    return out.reshape(B, 1, H, W)


def reference(x, w, *, kernel_size=7):
    """Pure-JAX reference of the PyTorch forward (NCHW)."""
    pad = 3 if kernel_size == 7 else 1
    avg = jnp.mean(x, axis=1, keepdims=True)
    mx = jnp.max(x, axis=1, keepdims=True)
    feat = jnp.concatenate([avg, mx], axis=1)                 # (B, 2, H, W)
    out = jax.lax.conv_general_dilated(
        feat, w, window_strides=(1, 1),
        padding=[(pad, pad), (pad, pad)],
        dimension_numbers=('NCHW', 'OIHW', 'NCHW'))
    return jax.nn.sigmoid(out)


if __name__ == "__main__":
    key = jax.random.PRNGKey(0)
    k1, k2 = jax.random.split(key)

    B, C, H, W = 2, 4, 16, 16
    K = 7

    x = jax.random.normal(k1, (B, C, H, W), jnp.float32)        # NCHW, as in PyTorch
    w = 0.3 * jax.random.normal(k2, (1, 2, K, K), jnp.float32)  # Conv2d(2,1,7,pad=3,bias=False)

    out = jax.block_until_ready(spatial_attention(x, w, kernel_size=K))
    ref = jax.block_until_ready(reference(x, w, kernel_size=K))

    assert out.shape == (B, 1, H, W)
    assert bool(jnp.allclose(out, ref, atol=1e-5, rtol=1e-5)), "kernel/reference mismatch"

    print("KERNEL_OK")
</pallas_src>

<mosaic_0001>
module attributes {stable_mosaic.version = 11 : i64} {
  func.func @spatial_attention_kernel(%arg0: i32, %arg1: memref<1x4x256xf32, #tpu.memory_space<vmem>>, %arg2: memref<98xf32, #tpu.memory_space<smem>>, %arg3: memref<7x256xf32, #tpu.memory_space<vmem>>, %arg4: memref<1x1x256xf32, #tpu.memory_space<vmem>>) attributes {dimension_semantics = [#tpu.dimension_semantics<parallel>], iteration_bounds = array<i64: 2>, scalar_prefetch = 0 : i64, scratch_operands = 0 : i64, tpu.core_type = #tpu.core_type<tc>, window_params = [{transform_indices = @transform_0, window_bounds = array<i64: 1, 4, 256>}, {transform_indices = @transform_1, window_bounds = array<i64: 98>}, {pipeline_mode = #tpu.pipeline_mode<synchronous>, transform_indices = @transform_2, window_bounds = array<i64: 7, 256>}, {transform_indices = @transform_3, window_bounds = array<i64: 1, 1, 256>}]} {
    %c0 = arith.constant 0 : index
    %c0_0 = arith.constant 0 : index
    %c0_1 = arith.constant 0 : index
    %0 = vector.load %arg1[%c0, %c0_0, %c0_1] : memref<1x4x256xf32, #tpu.memory_space<vmem>>, vector<1x4x256xf32>
    %cst = arith.constant dense<0.000000e+00> : vector<1x256xf32>
    %1 = vector.multi_reduction <add>, %0, %cst [1] : vector<1x4x256xf32> to vector<1x256xf32>
    %cst_2 = arith.constant 4.000000e+00 : f32
    %2 = vector.broadcast %cst_2 : f32 to vector<1x256xf32>
    %3 = arith.divf %1, %2 : vector<1x256xf32>
    %cst_3 = arith.constant dense<0xFF800000> : vector<1x256xf32>
    %4 = vector.multi_reduction <maximumf>, %0, %cst_3 [1] : vector<1x4x256xf32> to vector<1x256xf32>
    %cst_4 = arith.constant 0.000000e+00 : f32
    %5 = vector.broadcast %cst_4 : f32 to vector<1x51xf32>
    %cst_5 = arith.constant 0.000000e+00 : f32
    %6 = vector.broadcast %cst_5 : f32 to vector<1x256xf32>
    %c0_6 = arith.constant 0 : index
    %c0_7 = arith.constant 0 : index
    %7 = vector.load %arg3[%c0_6, %c0_7] : memref<7x256xf32, #tpu.memory_space<vmem>>, vector<1x256xf32>
    %8 = arith.mulf %3, %7 : vector<1x256xf32>
    %9 = arith.mulf %4, %7 : vector<1x256xf32>
    %c0_8 = arith.constant 0 : index
    %10 = memref.load %arg2[%c0_8] : memref<98xf32, #tpu.memory_space<smem>>
    %11 = vector.extract_strided_slice %8 {offsets = [0, 0], sizes = [1, 205], strides = [1, 1]} : vector<1x256xf32> to vector<1x205xf32>
    %12 = tpu.concatenate %5, %11 in 1 : vector<1x51xf32>, vector<1x205xf32> -> vector<1x256xf32>
    %13 = vector.broadcast %10 : f32 to vector<1x256xf32>
    %14 = arith.mulf %13, %12 : vector<1x256xf32>
    %15 = arith.addf %6, %14 : vector<1x256xf32>
    %c7 = arith.constant 7 : index
    %16 = memref.load %arg2[%c7] : memref<98xf32, #tpu.memory_space<smem>>
    %17 = vector.extract_strided_slice %5 {offsets = [0, 0], sizes = [1, 35], strides = [1, 1]} : vector<1x51xf32> to vector<1x35xf32>
    %18 = vector.extract_strided_slice %8 {offsets = [0, 0], sizes = [1, 221], strides = [1, 1]} : vector<1x256xf32> to vector<1x221xf32>
    %19 = tpu.concatenate %17, %18 in 1 : vector<1x35xf32>, vector<1x221xf32> -> vector<1x256xf32>
    %20 = vector.broadcast %16 : f32 to vector<1x256xf32>
    %21 = arith.mulf %20, %19 : vector<1x256xf32>
    %22 = arith.addf %15, %21 : vector<1x256xf32>
    %c14 = arith.constant 14 : index
    %23 = memref.load %arg2[%c14] : memref<98xf32, #tpu.memory_space<smem>>
    %24 = vector.extract_strided_slice %5 {offsets = [0, 0], sizes = [1, 19], strides = [1, 1]} : vector<1x51xf32> to vector<1x19xf32>
    %25 = vector.extract_strided_slice %8 {offsets = [0, 0], sizes = [1, 237], strides = [1, 1]} : vector<1x256xf32> to vector<1x237xf32>
    %26 = tpu.concatenate %24, %25 in 1 : vector<1x19xf32>, vector<1x237xf32> -> vector<1x256xf32>
    %27 = vector.broadcast %23 : f32 to vector<1x256xf32>
    %28 = arith.mulf %27, %26 : vector<1x256xf32>
    %29 = arith.addf %22, %28 : vector<1x256xf32>
    %c21 = arith.constant 21 : index
    %30 = memref.load %arg2[%c21] : memref<98xf32, #tpu.memory_space<smem>>
    %31 = vector.extract_strided_slice %5 {offsets = [0, 0], sizes = [1, 3], strides = [1, 1]} : vector<1x51xf32> to vector<1x3xf32>
    %32 = vector.extract_strided_slice %8 {offsets = [0, 0], sizes = [1, 253], strides = [1, 1]} : vector<1x256xf32> to vector<1x253xf32>
    %33 = tpu.concatenate %31, %32 in 1 : vector<1x3xf32>, vector<1x253xf32> -> vector<1x256xf32>
    %34 = vector.broadcast %30 : f32 to vector<1x256xf32>
    %35 = arith.mulf %34, %33 : vector<1x256xf32>
    %36 = arith.addf %29, %35 : vector<1x256xf32>
    %c28 = arith.constant 28 : index
    %37 = memref.load %arg2[%c28] : memref<98xf32, #tpu.memory_space<smem>>
    %38 = vector.extract_strided_slice %8 {offsets = [0, 13], sizes = [1, 243], strides = [1, 1]} : vector<1x256xf32> to vector<1x243xf32>
    %39 = vector.extract_strided_slice %5 {offsets = [0, 0], sizes = [1, 13], strides = [1, 1]} : vector<1x51xf32> to vector<1x13xf32>
    %40 = tpu.concatenate %38, %39 in 1 : vector<1x243xf32>, vector<1x13xf32> -> vector<1x256xf32>
    %41 = vector.broadcast %37 : f32 to vector<1x256xf32>
    %42 = arith.mulf %41, %40 : vector<1x256xf32>
    %43 = arith.addf %36, %42 : vector<1x256xf32>
    %c35 = arith.constant 35 : index
    %44 = memref.load %arg2[%c35] : memref<98xf32, #tpu.memory_space<smem>>
    %45 = vector.extract_strided_slice %8 {offsets = [0, 29], sizes = [1, 227], strides = [1, 1]} : vector<1x256xf32> to vector<1x227xf32>
    %46 = vector.extract_strided_slice %5 {offsets = [0, 0], sizes = [1, 29], strides = [1, 1]} : vector<1x51xf32> to vector<1x29xf32>
    %47 = tpu.concatenate %45, %46 in 1 : vector<1x227xf32>, vector<1x29xf32> -> vector<1x256xf32>
    %48 = vector.broadcast %44 : f32 to vector<1x256xf32>
    %49 = arith.mulf %48, %47 : vector<1x256xf32>
    %50 = arith.addf %43, %49 : vector<1x256xf32>
    %c42 = arith.constant 42 : index
    %51 = memref.load %arg2[%c42] : memref<98xf32, #tpu.memory_space<smem>>
    %52 = vector.extract_strided_slice %8 {offsets = [0, 45], sizes = [1, 211], strides = [1, 1]} : vector<1x256xf32> to vector<1x211xf32>
    %53 = vector.extract_strided_slice %5 {offsets = [0, 0], sizes = [1, 45], strides = [1, 1]} : vector<1x51xf32> to vector<1x45xf32>
    %54 = tpu.concatenate %52, %53 in 1 : vector<1x211xf32>, vector<1x45xf32> -> vector<1x256xf32>
    %55 = vector.broadcast %51 : f32 to vector<1x256xf32>
    %56 = arith.mulf %55, %54 : vector<1x256xf32>
    %57 = arith.addf %50, %56 : vector<1x256xf32>
    %c49 = arith.constant 49 : index
    %58 = memref.load %arg2[%c49] : memref<98xf32, #tpu.memory_space<smem>>
    %59 = vector.extract_strided_slice %9 {offsets = [0, 0], sizes = [1, 205], strides = [1, 1]} : vector<1x256xf32> to vector<1x205xf32>
    %60 = tpu.concatenate %5, %59 in 1 : vector<1x51xf32>, vector<1x205xf32> -> vector<1x256xf32>
    %61 = vector.broadcast %58 : f32 to vector<1x256xf32>
    %62 = arith.mulf %61, %60 : vector<1x256xf32>
    %63 = arith.addf %57, %62 : vector<1x256xf32>
    %c56 = arith.constant 56 : index
    %64 = memref.load %arg2[%c56] : memref<98xf32, #tpu.memory_space<smem>>
    %65 = vector.extract_strided_slice %5 {offsets = [0, 0], sizes = [1, 35], strides = [1, 1]} : vector<1x51xf32> to vector<1x35xf32>
    %66 = vector.extract_strided_slice %9 {offsets = [0, 0], sizes = [1, 221], strides = [1, 1]} : vector<1x256xf32> to vector<1x221xf32>
    %67 = tpu.concatenate %65, %66 in 1 : vector<1x35xf32>, vector<1x221xf32> -> vector<1x256xf32>
    %68 = vector.broadcast %64 : f32 to vector<1x256xf32>
    %69 = arith.mulf %68, %67 : vector<1x256xf32>
    %70 = arith.addf %63, %69 : vector<1x256xf32>
    %c63 = arith.constant 63 : index
    %71 = memref.load %arg2[%c63] : memref<98xf32, #tpu.memory_space<smem>>
    %72 = vector.extract_strided_slice %5 {offsets = [0, 0], sizes = [1, 19], strides = [1, 1]} : vector<1x51xf32> to vector<1x19xf32>
    %73 = vector.extract_strided_slice %9 {offsets = [0, 0], sizes = [1, 237], strides = [1, 1]} : vector<1x256xf32> to vector<1x237xf32>
    %74 = tpu.concatenate %72, %73 in 1 : vector<1x19xf32>, vector<1x237xf32> -> vector<1x256xf32>
    %75 = vector.broadcast %71 : f32 to vector<1x256xf32>
    %76 = arith.mulf %75, %74 : vector<1x256xf32>
    %77 = arith.addf %70, %76 : vector<1x256xf32>
    %c70 = arith.constant 70 : index
    %78 = memref.load %arg2[%c70] : memref<98xf32, #tpu.memory_space<smem>>
    %79 = vector.extract_strided_slice %5 {offsets = [0, 0], sizes = [1, 3], strides = [1, 1]} : vector<1x51xf32> to vector<1x3xf32>
    %80 = vector.extract_strided_slice %9 {offsets = [0, 0], sizes = [1, 253], strides = [1, 1]} : vector<1x256xf32> to vector<1x253xf32>
    %81 = tpu.concatenate %79, %80 in 1 : vector<1x3xf32>, vector<1x253xf32> -> vector<1x256xf32>
    %82 = vector.broadcast %78 : f32 to vector<1x256xf32>
    %83 = arith.mulf %82, %81 : vector<1x256xf32>
    %84 = arith.addf %77, %83 : vector<1x256xf32>
    %c77 = arith.constant 77 : index
    %85 = memref.load %arg2[%c77] : memref<98xf32, #tpu.memory_space<smem>>
    %86 = vector.extract_strided_slice %9 {offsets = [0, 13], sizes = [1, 243], strides = [1, 1]} : vector<1x256xf32> to vector<1x243xf32>
    %87 = vector.extract_strided_slice %5 {offsets = [0, 0], sizes = [1, 13], strides = [1, 1]} : vector<1x51xf32> to vector<1x13xf32>
    %88 = tpu.concatenate %86, %87 in 1 : vector<1x243xf32>, vector<1x13xf32> -> vector<1x256xf32>
    %89 = vector.broadcast %85 : f32 to vector<1x256xf32>
    %90 = arith.mulf %89, %88 : vector<1x256xf32>
    %91 = arith.addf %84, %90 : vector<1x256xf32>
    %c84 = arith.constant 84 : index
    %92 = memref.load %arg2[%c84] : memref<98xf32, #tpu.memory_space<smem>>
    %93 = vector.extract_strided_slice %9 {offsets = [0, 29], sizes = [1, 227], strides = [1, 1]} : vector<1x256xf32> to vector<1x227xf32>
    %94 = vector.extract_strided_slice %5 {offsets = [0, 0], sizes = [1, 29], strides = [1, 1]} : vector<1x51xf32> to vector<1x29xf32>
    %95 = tpu.concatenate %93, %94 in 1 : vector<1x227xf32>, vector<1x29xf32> -> vector<1x256xf32>
    %96 = vector.broadcast %92 : f32 to vector<1x256xf32>
    %97 = arith.mulf %96, %95 : vector<1x256xf32>
    %98 = arith.addf %91, %97 : vector<1x256xf32>
    %c91 = arith.constant 91 : index
    %99 = memref.load %arg2[%c91] : memref<98xf32, #tpu.memory_space<smem>>
    %100 = vector.extract_strided_slice %9 {offsets = [0, 45], sizes = [1, 211], strides = [1, 1]} : vector<1x256xf32> to vector<1x211xf32>
    %101 = vector.extract_strided_slice %5 {offsets = [0, 0], sizes = [1, 45], strides = [1, 1]} : vector<1x51xf32> to vector<1x45xf32>
    %102 = tpu.concatenate %100, %101 in 1 : vector<1x211xf32>, vector<1x45xf32> -> vector<1x256xf32>
    %103 = vector.broadcast %99 : f32 to vector<1x256xf32>
    %104 = arith.mulf %103, %102 : vector<1x256xf32>
    %105 = arith.addf %98, %104 : vector<1x256xf32>
    %c1 = arith.constant 1 : index
    %c0_9 = arith.constant 0 : index
    %106 = vector.load %arg3[%c1, %c0_9] : memref<7x256xf32, #tpu.memory_space<vmem>>, vector<1x256xf32>
    %107 = arith.mulf %3, %106 : vector<1x256xf32>
    %108 = arith.mulf %4, %106 : vector<1x256xf32>
    %c1_10 = arith.constant 1 : index
    %109 = memref.load %arg2[%c1_10] : memref<98xf32, #tpu.memory_space<smem>>
    %110 = vector.extract_strided_slice %5 {offsets = [0, 0], sizes = [1, 50], strides = [1, 1]} : vector<1x51xf32> to vector<1x50xf32>
    %111 = vector.extract_strided_slice %107 {offsets = [0, 0], sizes = [1, 206], strides = [1, 1]} : vector<1x256xf32> to vector<1x206xf32>
    %112 = tpu.concatenate %110, %111 in 1 : vector<1x50xf32>, vector<1x206xf32> -> vector<1x256xf32>
    %113 = vector.broadcast %109 : f32 to vector<1x256xf32>
    %114 = arith.mulf %113, %112 : vector<1x256xf32>
    %115 = arith.addf %105, %114 : vector<1x256xf32>
    %c8 = arith.constant 8 : index
    %116 = memref.load %arg2[%c8] : memref<98xf32, #tpu.memory_space<smem>>
    %117 = vector.extract_strided_slice %5 {offsets = [0, 0], sizes = [1, 34], strides = [1, 1]} : vector<1x51xf32> to vector<1x34xf32>
    %118 = vector.extract_strided_slice %107 {offsets = [0, 0], sizes = [1, 222], strides = [1, 1]} : vector<1x256xf32> to vector<1x222xf32>
    %119 = tpu.concatenate %117, %118 in 1 : vector<1x34xf32>, vector<1x222xf32> -> vector<1x256xf32>
    %120 = vector.broadcast %116 : f32 to vector<1x256xf32>
    %121 = arith.mulf %120, %119 : vector<1x256xf32>
    %122 = arith.addf %115, %121 : vector<1x256xf32>
    %c15 = arith.constant 15 : index
    %123 = memref.load %arg2[%c15] : memref<98xf32, #tpu.memory_space<smem>>
    %124 = vector.extract_strided_slice %5 {offsets = [0, 0], sizes = [1, 18], strides = [1, 1]} : vector<1x51xf32> to vector<1x18xf32>
    %125 = vector.extract_strided_slice %107 {offsets = [0, 0], sizes = [1, 238], strides = [1, 1]} : vector<1x256xf32> to vector<1x238xf32>
    %126 = tpu.concatenate %124, %125 in 1 : vector<1x18xf32>, vector<1x238xf32> -> vector<1x256xf32>
    %127 = vector.broadcast %123 : f32 to vector<1x256xf32>
    %128 = arith.mulf %127, %126 : vector<1x256xf32>
    %129 = arith.addf %122, %128 : vector<1x256xf32>
    %c22 = arith.constant 22 : index
    %130 = memref.load %arg2[%c22] : memref<98xf32, #tpu.memory_space<smem>>
    %131 = vector.extract_strided_slice %5 {offsets = [0, 0], sizes = [1, 2], strides = [1, 1]} : vector<1x51xf32> to vector<1x2xf32>
    %132 = vector.extract_strided_slice %107 {offsets = [0, 0], sizes = [1, 254], strides = [1, 1]} : vector<1x256xf32> to vector<1x254xf32>
    %133 = tpu.concatenate %131, %132 in 1 : vector<1x2xf32>, vector<1x254xf32> -> vector<1x256xf32>
    %134 = vector.broadcast %130 : f32 to vector<1x256xf32>
    %135 = arith.mulf %134, %133 : vector<1x256xf32>
    %136 = arith.addf %129, %135 : vector<1x256xf32>
    %c29 = arith.constant 29 : index
    %137 = memref.load %arg2[%c29] : memref<98xf32, #tpu.memory_space<smem>>
    %138 = vector.extract_strided_slice %107 {offsets = [0, 14], sizes = [1, 242], strides = [1, 1]} : vector<1x256xf32> to vector<1x242xf32>
    %139 = vector.extract_strided_slice %5 {offsets = [0, 0], sizes = [1, 14], strides = [1, 1]} : vector<1x51xf32> to vector<1x14xf32>
    %140 = tpu.concatenate %138, %139 in 1 : vector<1x242xf32>, vector<1x14xf32> -> vector<1x256xf32>
    %141 = vector.broadcast %137 : f32 to vector<1x256xf32>
    %142 = arith.mulf %141, %140 : vector<1x256xf32>
    %143 = arith.addf %136, %142 : vector<1x256xf32>
    %c36 = arith.constant 36 : index
    %144 = memref.load %arg2[%c36] : memref<98xf32, #tpu.memory_space<smem>>
    %145 = vector.extract_strided_slice %107 {offsets = [0, 30], sizes = [1, 226], strides = [1, 1]} : vector<1x256xf32> to vector<1x226xf32>
    %146 = vector.extract_strided_slice %5 {offsets = [0, 0], sizes = [1, 30], strides = [1, 1]} : vector<1x51xf32> to vector<1x30xf32>
    %147 = tpu.concatenate %145, %146 in 1 : vector<1x226xf32>, vector<1x30xf32> -> vector<1x256xf32>
    %148 = vector.broadcast %144 : f32 to vector<1x256xf32>
    %149 = arith.mulf %148, %147 : vector<1x256xf32>
    %150 = arith.addf %143, %149 : vector<1x256xf32>
    %c43 = arith.constant 43 : index
    %151 = memref.load %arg2[%c43] : memref<98xf32, #tpu.memory_space<smem>>
    %152 = vector.extract_strided_slice %107 {offsets = [0, 46], sizes = [1, 210], strides = [1, 1]} : vector<1x256xf32> to vector<1x210xf32>
    %153 = vector.extract_strided_slice %5 {offsets = [0, 0], sizes = [1, 46], strides = [1, 1]} : vector<1x51xf32> to vector<1x46xf32>
    %154 = tpu.concatenate %152, %153 in 1 : vector<1x210xf32>, vector<1x46xf32> -> vector<1x256xf32>
    %155 = vector.broadcast %151 : f32 to vector<1x256xf32>
    %156 = arith.mulf %155, %154 : vector<1x256xf32>
    %157 = arith.addf %150, %156 : vector<1x256xf32>
    %c50 = arith.constant 50 : index
    %158 = memref.load %arg2[%c50] : memref<98xf32, #tpu.memory_space<smem>>
    %159 = vector.extract_strided_slice %5 {offsets = [0, 0], sizes = [1, 50], strides = [1, 1]} : vector<1x51xf32> to vector<1x50xf32>
    %160 = vector.extract_strided_slice %108 {offsets = [0, 0], sizes = [1, 206], strides = [1, 1]} : vector<1x256xf32> to vector<1x206xf32>
    %161 = tpu.concatenate %159, %160 in 1 : vector<1x50xf32>, vector<1x206xf32> -> vector<1x256xf32>
    %162 = vector.broadcast %158 : f32 to vector<1x256xf32>
    %163 = arith.mulf %162, %161 : vector<1x256xf32>
    %164 = arith.addf %157, %163 : vector<1x256xf32>
    %c57 = arith.constant 57 : index
    %165 = memref.load %arg2[%c57] : memref<98xf32, #tpu.memory_space<smem>>
    %166 = vector.extract_strided_slice %5 {offsets = [0, 0], sizes = [1, 34], strides = [1, 1]} : vector<1x51xf32> to vector<1x34xf32>
    %167 = vector.extract_strided_slice %108 {offsets = [0, 0], sizes = [1, 222], strides = [1, 1]} : vector<1x256xf32> to vector<1x222xf32>
    %168 = tpu.concatenate %166, %167 in 1 : vector<1x34xf32>, vector<1x222xf32> -> vector<1x256xf32>
    %169 = vector.broadcast %165 : f32 to vector<1x256xf32>
    %170 = arith.mulf %169, %168 : vector<1x256xf32>
    %171 = arith.addf %164, %170 : vector<1x256xf32>
    %c64 = arith.constant 64 : index
    %172 = memref.load %arg2[%c64] : memref<98xf32, #tpu.memory_space<smem>>
    %173 = vector.extract_strided_slice %5 {offsets = [0, 0], sizes = [1, 18], strides = [1, 1]} : vector<1x51xf32> to vector<1x18xf32>
    %174 = vector.extract_strided_slice %108 {offsets = [0, 0], sizes = [1, 238], strides = [1, 1]} : vector<1x256xf32> to vector<1x238xf32>
    %175 = tpu.concatenate %173, %174 in 1 : vector<1x18xf32>, vector<1x238xf32> -> vector<1x256xf32>
    %176 = vector.broadcast %172 : f32 to vector<1x256xf32>
    %177 = arith.mulf %176, %175 : vector<1x256xf32>
    %178 = arith.addf %171, %177 : vector<1x256xf32>
    %c71 = arith.constant 71 : index
    %179 = memref.load %arg2[%c71] : memref<98xf32, #tpu.memory_space<smem>>
    %180 = vector.extract_strided_slice %5 {offsets = [0, 0], sizes = [1, 2], strides = [1, 1]} : vector<1x51xf32> to vector<1x2xf32>
    %181 = vector.extract_strided_slice %108 {offsets = [0, 0], sizes = [1, 254], strides = [1, 1]} : vector<1x256xf32> to vector<1x254xf32>
    %182 = tpu.concatenate %180, %181 in 1 : vector<1x2xf32>, vector<1x254xf32> -> vector<1x256xf32>
    %183 = vector.broadcast %179 : f32 to vector<1x256xf32>
    %184 = arith.mulf %183, %182 : vector<1x256xf32>
    %185 = arith.addf %178, %184 : vector<1x256xf32>
    %c78 = arith.constant 78 : index
    %186 = memref.load %arg2[%c78] : memref<98xf32, #tpu.memory_space<smem>>
    %187 = vector.extract_strided_slice %108 {offsets = [0, 14], sizes = [1, 242], strides = [1, 1]} : vector<1x256xf32> to vector<1x242xf32>
    %188 = vector.extract_strided_slice %5 {offsets = [0, 0], sizes = [1, 14], strides = [1, 1]} : vector<1x51xf32> to vector<1x14xf32>
    %189 = tpu.concatenate %187, %188 in 1 : vector<1x242xf32>, vector<1x14xf32> -> vector<1x256xf32>
    %190 = vector.broadcast %186 : f32 to vector<1x256xf32>
    %191 = arith.mulf %190, %189 : vector<1x256xf32>
    %192 = arith.addf %185, %191 : vector<1x256xf32>
    %c85 = arith.constant 85 : index
    %193 = memref.load %arg2[%c85] : memref<98xf32, #tpu.memory_space<smem>>
    %194 = vector.extract_strided_slice %108 {offsets = [0, 30], sizes = [1, 226], strides = [1, 1]} : vector<1x256xf32> to vector<1x226xf32>
    %195 = vector.extract_strided_slice %5 {offsets = [0, 0], sizes = [1, 30], strides = [1, 1]} : vector<1x51xf32> to vector<1x30xf32>
    %196 = tpu.concatenate %194, %195 in 1 : vector<1x226xf32>, vector<1x30xf32> -> vector<1x256xf32>
    %197 = vector.broadcast %193 : f32 to vector<1x256xf32>
    %198 = arith.mulf %197, %196 : vector<1x256xf32>
    %199 = arith.addf %192, %198 : vector<1x256xf32>
    %c92 = arith.constant 92 : index
    %200 = memref.load %arg2[%c92] : memref<98xf32, #tpu.memory_space<smem>>
    %201 = vector.extract_strided_slice %108 {offsets = [0, 46], sizes = [1, 210], strides = [1, 1]} : vector<1x256xf32> to vector<1x210xf32>
    %202 = vector.extract_strided_slice %5 {offsets = [0, 0], sizes = [1, 46], strides = [1, 1]} : vector<1x51xf32> to vector<1x46xf32>
    %203 = tpu.concatenate %201, %202 in 1 : vector<1x210xf32>, vector<1x46xf32> -> vector<1x256xf32>
    %204 = vector.broadcast %200 : f32 to vector<1x256xf32>
    %205 = arith.mulf %204, %203 : vector<1x256xf32>
    %206 = arith.addf %199, %205 : vector<1x256xf32>
    %c2 = arith.constant 2 : index
    %c0_11 = arith.constant 0 : index
    %207 = vector.load %arg3[%c2, %c0_11] : memref<7x256xf32, #tpu.memory_space<vmem>>, vector<1x256xf32>
    %208 = arith.mulf %3, %207 : vector<1x256xf32>
    %209 = arith.mulf %4, %207 : vector<1x256xf32>
    %c2_12 = arith.constant 2 : index
    %210 = memref.load %arg2[%c2_12] : memref<98xf32, #tpu.memory_space<smem>>
    %211 = vector.extract_strided_slice %5 {offsets = [0, 0], sizes = [1, 49], strides = [1, 1]} : vector<1x51xf32> to vector<1x49xf32>
    %212 = vector.extract_strided_slice %208 {offsets = [0, 0], sizes = [1, 207], strides = [1, 1]} : vector<1x256xf32> to vector<1x207xf32>
    %213 = tpu.concatenate %211, %212 in 1 : vector<1x49xf32>, vector<1x207xf32> -> vector<1x256xf32>
    %214 = vector.broadcast %210 : f32 to vector<1x256xf32>
    %215 = arith.mulf %214, %213 : vector<1x256xf32>
    %216 = arith.addf %206, %215 : vector<1x256xf32>
    %c9 = arith.constant 9 : index
    %217 = memref.load %arg2[%c9] : memref<98xf32, #tpu.memory_space<smem>>
    %218 = vector.extract_strided_slice %5 {offsets = [0, 0], sizes = [1, 33], strides = [1, 1]} : vector<1x51xf32> to vector<1x33xf32>
    %219 = vector.extract_strided_slice %208 {offsets = [0, 0], sizes = [1, 223], strides = [1, 1]} : vector<1x256xf32> to vector<1x223xf32>
    %220 = tpu.concatenate %218, %219 in 1 : vector<1x33xf32>, vector<1x223xf32> -> vector<1x256xf32>
    %221 = vector.broadcast %217 : f32 to vector<1x256xf32>
    %222 = arith.mulf %221, %220 : vector<1x256xf32>
    %223 = arith.addf %216, %222 : vector<1x256xf32>
    %c16 = arith.constant 16 : index
    %224 = memref.load %arg2[%c16] : memref<98xf32, #tpu.memory_space<smem>>
    %225 = vector.extract_strided_slice %5 {offsets = [0, 0], sizes = [1, 17], strides = [1, 1]} : vector<1x51xf32> to vector<1x17xf32>
    %226 = vector.extract_strided_slice %208 {offsets = [0, 0], sizes = [1, 239], strides = [1, 1]} : vector<1x256xf32> to vector<1x239xf32>
    %227 = tpu.concatenate %225, %226 in 1 : vector<1x17xf32>, vector<1x239xf32> -> vector<1x256xf32>
    %228 = vector.broadcast %224 : f32 to vector<1x256xf32>
    %229 = arith.mulf %228, %227 : vector<1x256xf32>
    %230 = arith.addf %223, %229 : vector<1x256xf32>
    %c23 = arith.constant 23 : index
    %231 = memref.load %arg2[%c23] : memref<98xf32, #tpu.memory_space<smem>>
    %232 = vector.extract_strided_slice %5 {offsets = [0, 0], sizes = [1, 1], strides = [1, 1]} : vector<1x51xf32> to vector<1x1xf32>
    %233 = vector.extract_strided_slice %208 {offsets = [0, 0], sizes = [1, 255], strides = [1, 1]} : vector<1x256xf32> to vector<1x255xf32>
    %234 = tpu.concatenate %232, %233 in 1 : vector<1x1xf32>, vector<1x255xf32> -> vector<1x256xf32>
    %235 = vector.broadcast %231 : f32 to vector<1x256xf32>
    %236 = arith.mulf %235, %234 : vector<1x256xf32>
    %237 = arith.addf %230, %236 : vector<1x256xf32>
    %c30 = arith.constant 30 : index
    %238 = memref.load %arg2[%c30] : memref<98xf32, #tpu.memory_space<smem>>
    %239 = vector.extract_strided_slice %208 {offsets = [0, 15], sizes = [1, 241], strides = [1, 1]} : vector<1x256xf32> to vector<1x241xf32>
    %240 = vector.extract_strided_slice %5 {offsets = [0, 0], sizes = [1, 15], strides = [1, 1]} : vector<1x51xf32> to vector<1x15xf32>
    %241 = tpu.concatenate %239, %240 in 1 : vector<1x241xf32>, vector<1x15xf32> -> vector<1x256xf32>
    %242 = vector.broadcast %238 : f32 to vector<1x256xf32>
    %243 = arith.mulf %242, %241 : vector<1x256xf32>
    %244 = arith.addf %237, %243 : vector<1x256xf32>
    %c37 = arith.constant 37 : index
    %245 = memref.load %arg2[%c37] : memref<98xf32, #tpu.memory_space<smem>>
    %246 = vector.extract_strided_slice %208 {offsets = [0, 31], sizes = [1, 225], strides = [1, 1]} : vector<1x256xf32> to vector<1x225xf32>
    %247 = vector.extract_strided_slice %5 {offsets = [0, 0], sizes = [1, 31], strides = [1, 1]} : vector<1x51xf32> to vector<1x31xf32>
    %248 = tpu.concatenate %246, %247 in 1 : vector<1x225xf32>, vector<1x31xf32> -> vector<1x256xf32>
    %249 = vector.broadcast %245 : f32 to vector<1x256xf32>
    %250 = arith.mulf %249, %248 : vector<1x256xf32>
    %251 = arith.addf %244, %250 : vector<1x256xf32>
    %c44 = arith.constant 44 : index
    %252 = memref.load %arg2[%c44] : memref<98xf32, #tpu.memory_space<smem>>
    %253 = vector.extract_strided_slice %208 {offsets = [0, 47], sizes = [1, 209], strides = [1, 1]} : vector<1x256xf32> to vector<1x209xf32>
    %254 = vector.extract_strided_slice %5 {offsets = [0, 0], sizes = [1, 47], strides = [1, 1]} : vector<1x51xf32> to vector<1x47xf32>
    %255 = tpu.concatenate %253, %254 in 1 : vector<1x209xf32>, vector<1x47xf32> -> vector<1x256xf32>
    %256 = vector.broadcast %252 : f32 to vector<1x256xf32>
    %257 = arith.mulf %256, %255 : vector<1x256xf32>
    %258 = arith.addf %251, %257 : vector<1x256xf32>
    %c51 = arith.constant 51 : index
    %259 = memref.load %arg2[%c51] : memref<98xf32, #tpu.memory_space<smem>>
    %260 = vector.extract_strided_slice %5 {offsets = [0, 0], sizes = [1, 49], strides = [1, 1]} : vector<1x51xf32> to vector<1x49xf32>
    %261 = vector.extract_strided_slice %209 {offsets = [0, 0], sizes = [1, 207], strides = [1, 1]} : vector<1x256xf32> to vector<1x207xf32>
    %262 = tpu.concatenate %260, %261 in 1 : vector<1x49xf32>, vector<1x207xf32> -> vector<1x256xf32>
    %263 = vector.broadcast %259 : f32 to vector<1x256xf32>
    %264 = arith.mulf %263, %262 : vector<1x256xf32>
    %265 = arith.addf %258, %264 : vector<1x256xf32>
    %c58 = arith.constant 58 : index
    %266 = memref.load %arg2[%c58] : memref<98xf32, #tpu.memory_space<smem>>
    %267 = vector.extract_strided_slice %5 {offsets = [0, 0], sizes = [1, 33], strides = [1, 1]} : vector<1x51xf32> to vector<1x33xf32>
    %268 = vector.extract_strided_slice %209 {offsets = [0, 0], sizes = [1, 223], strides = [1, 1]} : vector<1x256xf32> to vector<1x223xf32>
    %269 = tpu.concatenate %267, %268 in 1 : vector<1x33xf32>, vector<1x223xf32> -> vector<1x256xf32>
    %270 = vector.broadcast %266 : f32 to vector<1x256xf32>
    %271 = arith.mulf %270, %269 : vector<1x256xf32>
    %272 = arith.addf %265, %271 : vector<1x256xf32>
    %c65 = arith.constant 65 : index
    %273 = memref.load %arg2[%c65] : memref<98xf32, #tpu.memory_space<smem>>
    %274 = vector.extract_strided_slice %5 {offsets = [0, 0], sizes = [1, 17], strides = [1, 1]} : vector<1x51xf32> to vector<1x17xf32>
    %275 = vector.extract_strided_slice %209 {offsets = [0, 0], sizes = [1, 239], strides = [1, 1]} : vector<1x256xf32> to vector<1x239xf32>
    %276 = tpu.concatenate %274, %275 in 1 : vector<1x17xf32>, vector<1x239xf32> -> vector<1x256xf32>
    %277 = vector.broadcast %273 : f32 to vector<1x256xf32>
    %278 = arith.mulf %277, %276 : vector<1x256xf32>
    %279 = arith.addf %272, %278 : vector<1x256xf32>
    %c72 = arith.constant 72 : index
    %280 = memref.load %arg2[%c72] : memref<98xf32, #tpu.memory_space<smem>>
    %281 = vector.extract_strided_slice %5 {offsets = [0, 0], sizes = [1, 1], strides = [1, 1]} : vector<1x51xf32> to vector<1x1xf32>
    %282 = vector.extract_strided_slice %209 {offsets = [0, 0], sizes = [1, 255], strides = [1, 1]} : vector<1x256xf32> to vector<1x255xf32>
    %283 = tpu.concatenate %281, %282 in 1 : vector<1x1xf32>, vector<1x255xf32> -> vector<1x256xf32>
    %284 = vector.broadcast %280 : f32 to vector<1x256xf32>
    %285 = arith.mulf %284, %283 : vector<1x256xf32>
    %286 = arith.addf %279, %285 : vector<1x256xf32>
    %c79 = arith.constant 79 : index
    %287 = memref.load %arg2[%c79] : memref<98xf32, #tpu.memory_space<smem>>
    %288 = vector.extract_strided_slice %209 {offsets = [0, 15], sizes = [1, 241], strides = [1, 1]} : vector<1x256xf32> to vector<1x241xf32>
    %289 = vector.extract_strided_slice %5 {offsets = [0, 0], sizes = [1, 15], strides = [1, 1]} : vector<1x51xf32> to vector<1x15xf32>
    %290 = tpu.concatenate %288, %289 in 1 : vector<1x241xf32>, vector<1x15xf32> -> vector<1x256xf32>
    %291 = vector.broadcast %287 : f32 to vector<1x256xf32>
    %292 = arith.mulf %291, %290 : vector<1x256xf32>
    %293 = arith.addf %286, %292 : vector<1x256xf32>
    %c86 = arith.constant 86 : index
    %294 = memref.load %arg2[%c86] : memref<98xf32, #tpu.memory_space<smem>>
    %295 = vector.extract_strided_slice %209 {offsets = [0, 31], sizes = [1, 225], strides = [1, 1]} : vector<1x256xf32> to vector<1x225xf32>
    %296 = vector.extract_strided_slice %5 {offsets = [0, 0], sizes = [1, 31], strides = [1, 1]} : vector<1x51xf32> to vector<1x31xf32>
    %297 = tpu.concatenate %295, %296 in 1 : vector<1x225xf32>, vector<1x31xf32> -> vector<1x256xf32>
    %298 = vector.broadcast %294 : f32 to vector<1x256xf32>
    %299 = arith.mulf %298, %297 : vector<1x256xf32>
    %300 = arith.addf %293, %299 : vector<1x256xf32>
    %c93 = arith.constant 93 : index
    %301 = memref.load %arg2[%c93] : memref<98xf32, #tpu.memory_space<smem>>
    %302 = vector.extract_strided_slice %209 {offsets = [0, 47], sizes = [1, 209], strides = [1, 1]} : vector<1x256xf32> to vector<1x209xf32>
    %303 = vector.extract_strided_slice %5 {offsets = [0, 0], sizes = [1, 47], strides = [1, 1]} : vector<1x51xf32> to vector<1x47xf32>
    %304 = tpu.concatenate %302, %303 in 1 : vector<1x209xf32>, vector<1x47xf32> -> vector<1x256xf32>
    %305 = vector.broadcast %301 : f32 to vector<1x256xf32>
    %306 = arith.mulf %305, %304 : vector<1x256xf32>
    %307 = arith.addf %300, %306 : vector<1x256xf32>
    %c3 = arith.constant 3 : index
    %c0_13 = arith.constant 0 : index
    %308 = vector.load %arg3[%c3, %c0_13] : memref<7x256xf32, #tpu.memory_space<vmem>>, vector<1x256xf32>
    %309 = arith.mulf %3, %308 : vector<1x256xf32>
    %310 = arith.mulf %4, %308 : vector<1x256xf32>
    %c3_14 = arith.constant 3 : index
    %311 = memref.load %arg2[%c3_14] : memref<98xf32, #tpu.memory_space<smem>>
    %312 = vector.extract_strided_slice %5 {offsets = [0, 0], sizes = [1, 48], strides = [1, 1]} : vector<1x51xf32> to vector<1x48xf32>
    %313 = vector.extract_strided_slice %309 {offsets = [0, 0], sizes = [1, 208], strides = [1, 1]} : vector<1x256xf32> to vector<1x208xf32>
    %314 = tpu.concatenate %312, %313 in 1 : vector<1x48xf32>, vector<1x208xf32> -> vector<1x256xf32>
    %315 = vector.broadcast %311 : f32 to vector<1x256xf32>
    %316 = arith.mulf %315, %314 : vector<1x256xf32>
    %317 = arith.addf %307, %316 : vector<1x256xf32>
    %c10 = arith.constant 10 : index
    %318 = memref.load %arg2[%c10] : memref<98xf32, #tpu.memory_space<smem>>
    %319 = vector.extract_strided_slice %5 {offsets = [0, 0], sizes = [1, 32], strides = [1, 1]} : vector<1x51xf32> to vector<1x32xf32>
    %320 = vector.extract_strided_slice %309 {offsets = [0, 0], sizes = [1, 224], strides = [1, 1]} : vector<1x256xf32> to vector<1x224xf32>
    %321 = tpu.concatenate %319, %320 in 1 : vector<1x32xf32>, vector<1x224xf32> -> vector<1x256xf32>
    %322 = vector.broadcast %318 : f32 to vector<1x256xf32>
    %323 = arith.mulf %322, %321 : vector<1x256xf32>
    %324 = arith.addf %317, %323 : vector<1x256xf32>
    %c17 = arith.constant 17 : index
    %325 = memref.load %arg2[%c17] : memref<98xf32, #tpu.memory_space<smem>>
    %326 = vector.extract_strided_slice %5 {offsets = [0, 0], sizes = [1, 16], strides = [1, 1]} : vector<1x51xf32> to vector<1x16xf32>
    %327 = vector.extract_strided_slice %309 {offsets = [0, 0], sizes = [1, 240], strides = [1, 1]} : vector<1x256xf32> to vector<1x240xf32>
    %328 = tpu.concatenate %326, %327 in 1 : vector<1x16xf32>, vector<1x240xf32> -> vector<1x256xf32>
    %329 = vector.broadcast %325 : f32 to vector<1x256xf32>
    %330 = arith.mulf %329, %328 : vector<1x256xf32>
    %331 = arith.addf %324, %330 : vector<1x256xf32>
    %c24 = arith.constant 24 : index
    %332 = memref.load %arg2[%c24] : memref<98xf32, #tpu.memory_space<smem>>
    %333 = vector.broadcast %332 : f32 to vector<1x256xf32>
    %334 = arith.mulf %333, %309 : vector<1x256xf32>
    %335 = arith.addf %331, %334 : vector<1x256xf32>
    %c31 = arith.constant 31 : index
    %336 = memref.load %arg2[%c31] : memref<98xf32, #tpu.memory_space<smem>>
    %337 = vector.extract_strided_slice %309 {offsets = [0, 16], sizes = [1, 240], strides = [1, 1]} : vector<1x256xf32> to vector<1x240xf32>
    %338 = vector.extract_strided_slice %5 {offsets = [0, 0], sizes = [1, 16], strides = [1, 1]} : vector<1x51xf32> to vector<1x16xf32>
    %339 = tpu.concatenate %337, %338 in 1 : vector<1x240xf32>, vector<1x16xf32> -> vector<1x256xf32>
    %340 = vector.broadcast %336 : f32 to vector<1x256xf32>
    %341 = arith.mulf %340, %339 : vector<1x256xf32>
    %342 = arith.addf %335, %341 : vector<1x256xf32>
    %c38 = arith.constant 38 : index
    %343 = memref.load %arg2[%c38] : memref<98xf32, #tpu.memory_space<smem>>
    %344 = vector.extract_strided_slice %309 {offsets = [0, 32], sizes = [1, 224], strides = [1, 1]} : vector<1x256xf32> to vector<1x224xf32>
    %345 = vector.extract_strided_slice %5 {offsets = [0, 0], sizes = [1, 32], strides = [1, 1]} : vector<1x51xf32> to vector<1x32xf32>
    %346 = tpu.concatenate %344, %345 in 1 : vector<1x224xf32>, vector<1x32xf32> -> vector<1x256xf32>
    %347 = vector.broadcast %343 : f32 to vector<1x256xf32>
    %348 = arith.mulf %347, %346 : vector<1x256xf32>
    %349 = arith.addf %342, %348 : vector<1x256xf32>
    %c45 = arith.constant 45 : index
    %350 = memref.load %arg2[%c45] : memref<98xf32, #tpu.memory_space<smem>>
    %351 = vector.extract_strided_slice %309 {offsets = [0, 48], sizes = [1, 208], strides = [1, 1]} : vector<1x256xf32> to vector<1x208xf32>
    %352 = vector.extract_strided_slice %5 {offsets = [0, 0], sizes = [1, 48], strides = [1, 1]} : vector<1x51xf32> to vector<1x48xf32>
    %353 = tpu.concatenate %351, %352 in 1 : vector<1x208xf32>, vector<1x48xf32> -> vector<1x256xf32>
    %354 = vector.broadcast %350 : f32 to vector<1x256xf32>
    %355 = arith.mulf %354, %353 : vector<1x256xf32>
    %356 = arith.addf %349, %355 : vector<1x256xf32>
    %c52 = arith.constant 52 : index
    %357 = memref.load %arg2[%c52] : memref<98xf32, #tpu.memory_space<smem>>
    %358 = vector.extract_strided_slice %5 {offsets = [0, 0], sizes = [1, 48], strides = [1, 1]} : vector<1x51xf32> to vector<1x48xf32>
    %359 = vector.extract_strided_slice %310 {offsets = [0, 0], sizes = [1, 208], strides = [1, 1]} : vector<1x256xf32> to vector<1x208xf32>
    %360 = tpu.concatenate %358, %359 in 1 : vector<1x48xf32>, vector<1x208xf32> -> vector<1x256xf32>
    %361 = vector.broadcast %357 : f32 to vector<1x256xf32>
    %362 = arith.mulf %361, %360 : vector<1x256xf32>
    %363 = arith.addf %356, %362 : vector<1x256xf32>
    %c59 = arith.constant 59 : index
    %364 = memref.load %arg2[%c59] : memref<98xf32, #tpu.memory_space<smem>>
    %365 = vector.extract_strided_slice %5 {offsets = [0, 0], sizes = [1, 32], strides = [1, 1]} : vector<1x51xf32> to vector<1x32xf32>
    %366 = vector.extract_strided_slice %310 {offsets = [0, 0], sizes = [1, 224], strides = [1, 1]} : vector<1x256xf32> to vector<1x224xf32>
    %367 = tpu.concatenate %365, %366 in 1 : vector<1x32xf32>, vector<1x224xf32> -> vector<1x256xf32>
    %368 = vector.broadcast %364 : f32 to vector<1x256xf32>
    %369 = arith.mulf %368, %367 : vector<1x256xf32>
    %370 = arith.addf %363, %369 : vector<1x256xf32>
    %c66 = arith.constant 66 : index
    %371 = memref.load %arg2[%c66] : memref<98xf32, #tpu.memory_space<smem>>
    %372 = vector.extract_strided_slice %5 {offsets = [0, 0], sizes = [1, 16], strides = [1, 1]} : vector<1x51xf32> to vector<1x16xf32>
    %373 = vector.extract_strided_slice %310 {offsets = [0, 0], sizes = [1, 240], strides = [1, 1]} : vector<1x256xf32> to vector<1x240xf32>
    %374 = tpu.concatenate %372, %373 in 1 : vector<1x16xf32>, vector<1x240xf32> -> vector<1x256xf32>
    %375 = vector.broadcast %371 : f32 to vector<1x256xf32>
    %376 = arith.mulf %375, %374 : vector<1x256xf32>
    %377 = arith.addf %370, %376 : vector<1x256xf32>
    %c73 = arith.constant 73 : index
    %378 = memref.load %arg2[%c73] : memref<98xf32, #tpu.memory_space<smem>>
    %379 = vector.broadcast %378 : f32 to vector<1x256xf32>
    %380 = arith.mulf %379, %310 : vector<1x256xf32>
    %381 = arith.addf %377, %380 : vector<1x256xf32>
    %c80 = arith.constant 80 : index
    %382 = memref.load %arg2[%c80] : memref<98xf32, #tpu.memory_space<smem>>
    %383 = vector.extract_strided_slice %310 {offsets = [0, 16], sizes = [1, 240], strides = [1, 1]} : vector<1x256xf32> to vector<1x240xf32>
    %384 = vector.extract_strided_slice %5 {offsets = [0, 0], sizes = [1, 16], strides = [1, 1]} : vector<1x51xf32> to vector<1x16xf32>
    %385 = tpu.concatenate %383, %384 in 1 : vector<1x240xf32>, vector<1x16xf32> -> vector<1x256xf32>
    %386 = vector.broadcast %382 : f32 to vector<1x256xf32>
    %387 = arith.mulf %386, %385 : vector<1x256xf32>
    %388 = arith.addf %381, %387 : vector<1x256xf32>
    %c87 = arith.constant 87 : index
    %389 = memref.load %arg2[%c87] : memref<98xf32, #tpu.memory_space<smem>>
    %390 = vector.extract_strided_slice %310 {offsets = [0, 32], sizes = [1, 224], strides = [1, 1]} : vector<1x256xf32> to vector<1x224xf32>
    %391 = vector.extract_strided_slice %5 {offsets = [0, 0], sizes = [1, 32], strides = [1, 1]} : vector<1x51xf32> to vector<1x32xf32>
    %392 = tpu.concatenate %390, %391 in 1 : vector<1x224xf32>, vector<1x32xf32> -> vector<1x256xf32>
    %393 = vector.broadcast %389 : f32 to vector<1x256xf32>
    %394 = arith.mulf %393, %392 : vector<1x256xf32>
    %395 = arith.addf %388, %394 : vector<1x256xf32>
    %c94 = arith.constant 94 : index
    %396 = memref.load %arg2[%c94] : memref<98xf32, #tpu.memory_space<smem>>
    %397 = vector.extract_strided_slice %310 {offsets = [0, 48], sizes = [1, 208], strides = [1, 1]} : vector<1x256xf32> to vector<1x208xf32>
    %398 = vector.extract_strided_slice %5 {offsets = [0, 0], sizes = [1, 48], strides = [1, 1]} : vector<1x51xf32> to vector<1x48xf32>
    %399 = tpu.concatenate %397, %398 in 1 : vector<1x208xf32>, vector<1x48xf32> -> vector<1x256xf32>
    %400 = vector.broadcast %396 : f32 to vector<1x256xf32>
    %401 = arith.mulf %400, %399 : vector<1x256xf32>
    %402 = arith.addf %395, %401 : vector<1x256xf32>
    %c4 = arith.constant 4 : index
    %c0_15 = arith.constant 0 : index
    %403 = vector.load %arg3[%c4, %c0_15] : memref<7x256xf32, #tpu.memory_space<vmem>>, vector<1x256xf32>
    %404 = arith.mulf %3, %403 : vector<1x256xf32>
    %405 = arith.mulf %4, %403 : vector<1x256xf32>
    %c4_16 = arith.constant 4 : index
    %406 = memref.load %arg2[%c4_16] : memref<98xf32, #tpu.memory_space<smem>>
    %407 = vector.extract_strided_slice %5 {offsets = [0, 0], sizes = [1, 47], strides = [1, 1]} : vector<1x51xf32> to vector<1x47xf32>
    %408 = vector.extract_strided_slice %404 {offsets = [0, 0], sizes = [1, 209], strides = [1, 1]} : vector<1x256xf32> to vector<1x209xf32>
    %409 = tpu.concatenate %407, %408 in 1 : vector<1x47xf32>, vector<1x209xf32> -> vector<1x256xf32>
    %410 = vector.broadcast %406 : f32 to vector<1x256xf32>
    %411 = arith.mulf %410, %409 : vector<1x256xf32>
    %412 = arith.addf %402, %411 : vector<1x256xf32>
    %c11 = arith.constant 11 : index
    %413 = memref.load %arg2[%c11] : memref<98xf32, #tpu.memory_space<smem>>
    %414 = vector.extract_strided_slice %5 {offsets = [0, 0], sizes = [1, 31], strides = [1, 1]} : vector<1x51xf32> to vector<1x31xf32>
    %415 = vector.extract_strided_slice %404 {offsets = [0, 0], sizes = [1, 225], strides = [1, 1]} : vector<1x256xf32> to vector<1x225xf32>
    %416 = tpu.concatenate %414, %415 in 1 : vector<1x31xf32>, vector<1x225xf32> -> vector<1x256xf32>
    %417 = vector.broadcast %413 : f32 to vector<1x256xf32>
    %418 = arith.mulf %417, %416 : vector<1x256xf32>
    %419 = arith.addf %412, %418 : vector<1x256xf32>
    %c18 = arith.constant 18 : index
    %420 = memref.load %arg2[%c18] : memref<98xf32, #tpu.memory_space<smem>>
    %421 = vector.extract_strided_slice %5 {offsets = [0, 0], sizes = [1, 15], strides = [1, 1]} : vector<1x51xf32> to vector<1x15xf32>
    %422 = vector.extract_strided_slice %404 {offsets = [0, 0], sizes = [1, 241], strides = [1, 1]} : vector<1x256xf32> to vector<1x241xf32>
    %423 = tpu.concatenate %421, %422 in 1 : vector<1x15xf32>, vector<1x241xf32> -> vector<1x256xf32>
    %424 = vector.broadcast %420 : f32 to vector<1x256xf32>
    %425 = arith.mulf %424, %423 : vector<1x256xf32>
    %426 = arith.addf %419, %425 : vector<1x256xf32>
    %c25 = arith.constant 25 : index
    %427 = memref.load %arg2[%c25] : memref<98xf32, #tpu.memory_space<smem>>
    %428 = vector.extract_strided_slice %404 {offsets = [0, 1], sizes = [1, 255], strides = [1, 1]} : vector<1x256xf32> to vector<1x255xf32>
    %429 = vector.extract_strided_slice %5 {offsets = [0, 0], sizes = [1, 1], strides = [1, 1]} : vector<1x51xf32> to vector<1x1xf32>
    %430 = tpu.concatenate %428, %429 in 1 : vector<1x255xf32>, vector<1x1xf32> -> vector<1x256xf32>
    %431 = vector.broadcast %427 : f32 to vector<1x256xf32>
    %432 = arith.mulf %431, %430 : vector<1x256xf32>
    %433 = arith.addf %426, %432 : vector<1x256xf32>
    %c32 = arith.constant 32 : index
    %434 = memref.load %arg2[%c32] : memref<98xf32, #tpu.memory_space<smem>>
    %435 = vector.extract_strided_slice %404 {offsets = [0, 17], sizes = [1, 239], strides = [1, 1]} : vector<1x256xf32> to vector<1x239xf32>
    %436 = vector.extract_strided_slice %5 {offsets = [0, 0], sizes = [1, 17], strides = [1, 1]} : vector<1x51xf32> to vector<1x17xf32>
    %437 = tpu.concatenate %435, %436 in 1 : vector<1x239xf32>, vector<1x17xf32> -> vector<1x256xf32>
    %438 = vector.broadcast %434 : f32 to vector<1x256xf32>
    %439 = arith.mulf %438, %437 : vector<1x256xf32>
    %440 = arith.addf %433, %439 : vector<1x256xf32>
    %c39 = arith.constant 39 : index
    %441 = memref.load %arg2[%c39] : memref<98xf32, #tpu.memory_space<smem>>
    %442 = vector.extract_strided_slice %404 {offsets = [0, 33], sizes = [1, 223], strides = [1, 1]} : vector<1x256xf32> to vector<1x223xf32>
    %443 = vector.extract_strided_slice %5 {offsets = [0, 0], sizes = [1, 33], strides = [1, 1]} : vector<1x51xf32> to vector<1x33xf32>
    %444 = tpu.concatenate %442, %443 in 1 : vector<1x223xf32>, vector<1x33xf32> -> vector<1x256xf32>
    %445 = vector.broadcast %441 : f32 to vector<1x256xf32>
    %446 = arith.mulf %445, %444 : vector<1x256xf32>
    %447 = arith.addf %440, %446 : vector<1x256xf32>
    %c46 = arith.constant 46 : index
    %448 = memref.load %arg2[%c46] : memref<98xf32, #tpu.memory_space<smem>>
    %449 = vector.extract_strided_slice %404 {offsets = [0, 49], sizes = [1, 207], strides = [1, 1]} : vector<1x256xf32> to vector<1x207xf32>
    %450 = vector.extract_strided_slice %5 {offsets = [0, 0], sizes = [1, 49], strides = [1, 1]} : vector<1x51xf32> to vector<1x49xf32>
    %451 = tpu.concatenate %449, %450 in 1 : vector<1x207xf32>, vector<1x49xf32> -> vector<1x256xf32>
    %452 = vector.broadcast %448 : f32 to vector<1x256xf32>
    %453 = arith.mulf %452, %451 : vector<1x256xf32>
    %454 = arith.addf %447, %453 : vector<1x256xf32>
    %c53 = arith.constant 53 : index
    %455 = memref.load %arg2[%c53] : memref<98xf32, #tpu.memory_space<smem>>
    %456 = vector.extract_strided_slice %5 {offsets = [0, 0], sizes = [1, 47], strides = [1, 1]} : vector<1x51xf32> to vector<1x47xf32>
    %457 = vector.extract_strided_slice %405 {offsets = [0, 0], sizes = [1, 209], strides = [1, 1]} : vector<1x256xf32> to vector<1x209xf32>
    %458 = tpu.concatenate %456, %457 in 1 : vector<1x47xf32>, vector<1x209xf32> -> vector<1x256xf32>
    %459 = vector.broadcast %455 : f32 to vector<1x256xf32>
    %460 = arith.mulf %459, %458 : vector<1x256xf32>
    %461 = arith.addf %454, %460 : vector<1x256xf32>
    %c60 = arith.constant 60 : index
    %462 = memref.load %arg2[%c60] : memref<98xf32, #tpu.memory_space<smem>>
    %463 = vector.extract_strided_slice %5 {offsets = [0, 0], sizes = [1, 31], strides = [1, 1]} : vector<1x51xf32> to vector<1x31xf32>
    %464 = vector.extract_strided_slice %405 {offsets = [0, 0], sizes = [1, 225], strides = [1, 1]} : vector<1x256xf32> to vector<1x225xf32>
    %465 = tpu.concatenate %463, %464 in 1 : vector<1x31xf32>, vector<1x225xf32> -> vector<1x256xf32>
    %466 = vector.broadcast %462 : f32 to vector<1x256xf32>
    %467 = arith.mulf %466, %465 : vector<1x256xf32>
    %468 = arith.addf %461, %467 : vector<1x256xf32>
    %c67 = arith.constant 67 : index
    %469 = memref.load %arg2[%c67] : memref<98xf32, #tpu.memory_space<smem>>
    %470 = vector.extract_strided_slice %5 {offsets = [0, 0], sizes = [1, 15], strides = [1, 1]} : vector<1x51xf32> to vector<1x15xf32>
    %471 = vector.extract_strided_slice %405 {offsets = [0, 0], sizes = [1, 241], strides = [1, 1]} : vector<1x256xf32> to vector<1x241xf32>
    %472 = tpu.concatenate %470, %471 in 1 : vector<1x15xf32>, vector<1x241xf32> -> vector<1x256xf32>
    %473 = vector.broadcast %469 : f32 to vector<1x256xf32>
    %474 = arith.mulf %473, %472 : vector<1x256xf32>
    %475 = arith.addf %468, %474 : vector<1x256xf32>
    %c74 = arith.constant 74 : index
    %476 = memref.load %arg2[%c74] : memref<98xf32, #tpu.memory_space<smem>>
    %477 = vector.extract_strided_slice %405 {offsets = [0, 1], sizes = [1, 255], strides = [1, 1]} : vector<1x256xf32> to vector<1x255xf32>
    %478 = vector.extract_strided_slice %5 {offsets = [0, 0], sizes = [1, 1], strides = [1, 1]} : vector<1x51xf32> to vector<1x1xf32>
    %479 = tpu.concatenate %477, %478 in 1 : vector<1x255xf32>, vector<1x1xf32> -> vector<1x256xf32>
    %480 = vector.broadcast %476 : f32 to vector<1x256xf32>
    %481 = arith.mulf %480, %479 : vector<1x256xf32>
    %482 = arith.addf %475, %481 : vector<1x256xf32>
    %c81 = arith.constant 81 : index
    %483 = memref.load %arg2[%c81] : memref<98xf32, #tpu.memory_space<smem>>
    %484 = vector.extract_strided_slice %405 {offsets = [0, 17], sizes = [1, 239], strides = [1, 1]} : vector<1x256xf32> to vector<1x239xf32>
    %485 = vector.extract_strided_slice %5 {offsets = [0, 0], sizes = [1, 17], strides = [1, 1]} : vector<1x51xf32> to vector<1x17xf32>
    %486 = tpu.concatenate %484, %485 in 1 : vector<1x239xf32>, vector<1x17xf32> -> vector<1x256xf32>
    %487 = vector.broadcast %483 : f32 to vector<1x256xf32>
    %488 = arith.mulf %487, %486 : vector<1x256xf32>
    %489 = arith.addf %482, %488 : vector<1x256xf32>
    %c88 = arith.constant 88 : index
    %490 = memref.load %arg2[%c88] : memref<98xf32, #tpu.memory_space<smem>>
    %491 = vector.extract_strided_slice %405 {offsets = [0, 33], sizes = [1, 223], strides = [1, 1]} : vector<1x256xf32> to vector<1x223xf32>
    %492 = vector.extract_strided_slice %5 {offsets = [0, 0], sizes = [1, 33], strides = [1, 1]} : vector<1x51xf32> to vector<1x33xf32>
    %493 = tpu.concatenate %491, %492 in 1 : vector<1x223xf32>, vector<1x33xf32> -> vector<1x256xf32>
    %494 = vector.broadcast %490 : f32 to vector<1x256xf32>
    %495 = arith.mulf %494, %493 : vector<1x256xf32>
    %496 = arith.addf %489, %495 : vector<1x256xf32>
    %c95 = arith.constant 95 : index
    %497 = memref.load %arg2[%c95] : memref<98xf32, #tpu.memory_space<smem>>
    %498 = vector.extract_strided_slice %405 {offsets = [0, 49], sizes = [1, 207], strides = [1, 1]} : vector<1x256xf32> to vector<1x207xf32>
    %499 = vector.extract_strided_slice %5 {offsets = [0, 0], sizes = [1, 49], strides = [1, 1]} : vector<1x51xf32> to vector<1x49xf32>
    %500 = tpu.concatenate %498, %499 in 1 : vector<1x207xf32>, vector<1x49xf32> -> vector<1x256xf32>
    %501 = vector.broadcast %497 : f32 to vector<1x256xf32>
    %502 = arith.mulf %501, %500 : vector<1x256xf32>
    %503 = arith.addf %496, %502 : vector<1x256xf32>
    %c5 = arith.constant 5 : index
    %c0_17 = arith.constant 0 : index
    %504 = vector.load %arg3[%c5, %c0_17] : memref<7x256xf32, #tpu.memory_space<vmem>>, vector<1x256xf32>
    %505 = arith.mulf %3, %504 : vector<1x256xf32>
    %506 = arith.mulf %4, %504 : vector<1x256xf32>
    %c5_18 = arith.constant 5 : index
    %507 = memref.load %arg2[%c5_18] : memref<98xf32, #tpu.memory_space<smem>>
    %508 = vector.extract_strided_slice %5 {offsets = [0, 0], sizes = [1, 46], strides = [1, 1]} : vector<1x51xf32> to vector<1x46xf32>
    %509 = vector.extract_strided_slice %505 {offsets = [0, 0], sizes = [1, 210], strides = [1, 1]} : vector<1x256xf32> to vector<1x210xf32>
    %510 = tpu.concatenate %508, %509 in 1 : vector<1x46xf32>, vector<1x210xf32> -> vector<1x256xf32>
    %511 = vector.broadcast %507 : f32 to vector<1x256xf32>
    %512 = arith.mulf %511, %510 : vector<1x256xf32>
    %513 = arith.addf %503, %512 : vector<1x256xf32>
    %c12 = arith.constant 12 : index
    %514 = memref.load %arg2[%c12] : memref<98xf32, #tpu.memory_space<smem>>
    %515 = vector.extract_strided_slice %5 {offsets = [0, 0], sizes = [1, 30], strides = [1, 1]} : vector<1x51xf32> to vector<1x30xf32>
    %516 = vector.extract_strided_slice %505 {offsets = [0, 0], sizes = [1, 226], strides = [1, 1]} : vector<1x256xf32> to vector<1x226xf32>
    %517 = tpu.concatenate %515, %516 in 1 : vector<1x30xf32>, vector<1x226xf32> -> vector<1x256xf32>
    %518 = vector.broadcast %514 : f32 to vector<1x256xf32>
    %519 = arith.mulf %518, %517 : vector<1x256xf32>
    %520 = arith.addf %513, %519 : vector<1x256xf32>
    %c19 = arith.constant 19 : index
    %521 = memref.load %arg2[%c19] : memref<98xf32, #tpu.memory_space<smem>>
    %522 = vector.extract_strided_slice %5 {offsets = [0, 0], sizes = [1, 14], strides = [1, 1]} : vector<1x51xf32> to vector<1x14xf32>
    %523 = vector.extract_strided_slice %505 {offsets = [0, 0], sizes = [1, 242], strides = [1, 1]} : vector<1x256xf32> to vector<1x242xf32>
    %524 = tpu.concatenate %522, %523 in 1 : vector<1x14xf32>, vector<1x242xf32> -> vector<1x256xf32>
    %525 = vector.broadcast %521 : f32 to vector<1x256xf32>
    %526 = arith.mulf %525, %524 : vector<1x256xf32>
    %527 = arith.addf %520, %526 : vector<1x256xf32>
    %c26 = arith.constant 26 : index
    %528 = memref.load %arg2[%c26] : memref<98xf32, #tpu.memory_space<smem>>
    %529 = vector.extract_strided_slice %505 {offsets = [0, 2], sizes = [1, 254], strides = [1, 1]} : vector<1x256xf32> to vector<1x254xf32>
    %530 = vector.extract_strided_slice %5 {offsets = [0, 0], sizes = [1, 2], strides = [1, 1]} : vector<1x51xf32> to vector<1x2xf32>
    %531 = tpu.concatenate %529, %530 in 1 : vector<1x254xf32>, vector<1x2xf32> -> vector<1x256xf32>
    %532 = vector.broadcast %528 : f32 to vector<1x256xf32>
    %533 = arith.mulf %532, %531 : vector<1x256xf32>
    %534 = arith.addf %527, %533 : vector<1x256xf32>
    %c33 = arith.constant 33 : index
    %535 = memref.load %arg2[%c33] : memref<98xf32, #tpu.memory_space<smem>>
    %536 = vector.extract_strided_slice %505 {offsets = [0, 18], sizes = [1, 238], strides = [1, 1]} : vector<1x256xf32> to vector<1x238xf32>
    %537 = vector.extract_strided_slice %5 {offsets = [0, 0], sizes = [1, 18], strides = [1, 1]} : vector<1x51xf32> to vector<1x18xf32>
    %538 = tpu.concatenate %536, %537 in 1 : vector<1x238xf32>, vector<1x18xf32> -> vector<1x256xf32>
    %539 = vector.broadcast %535 : f32 to vector<1x256xf32>
    %540 = arith.mulf %539, %538 : vector<1x256xf32>
    %541 = arith.addf %534, %540 : vector<1x256xf32>
    %c40 = arith.constant 40 : index
    %542 = memref.load %arg2[%c40] : memref<98xf32, #tpu.memory_space<smem>>
    %543 = vector.extract_strided_slice %505 {offsets = [0, 34], sizes = [1, 222], strides = [1, 1]} : vector<1x256xf32> to vector<1x222xf32>
    %544 = vector.extract_strided_slice %5 {offsets = [0, 0], sizes = [1, 34], strides = [1, 1]} : vector<1x51xf32> to vector<1x34xf32>
    %545 = tpu.concatenate %543, %544 in 1 : vector<1x222xf32>, vector<1x34xf32> -> vector<1x256xf32>
    %546 = vector.broadcast %542 : f32 to vector<1x256xf32>
    %547 = arith.mulf %546, %545 : vector<1x256xf32>
    %548 = arith.addf %541, %547 : vector<1x256xf32>
    %c47 = arith.constant 47 : index
    %549 = memref.load %arg2[%c47] : memref<98xf32, #tpu.memory_space<smem>>
    %550 = vector.extract_strided_slice %505 {offsets = [0, 50], sizes = [1, 206], strides = [1, 1]} : vector<1x256xf32> to vector<1x206xf32>
    %551 = vector.extract_strided_slice %5 {offsets = [0, 0], sizes = [1, 50], strides = [1, 1]} : vector<1x51xf32> to vector<1x50xf32>
    %552 = tpu.concatenate %550, %551 in 1 : vector<1x206xf32>, vector<1x50xf32> -> vector<1x256xf32>
    %553 = vector.broadcast %549 : f32 to vector<1x256xf32>
    %554 = arith.mulf %553, %552 : vector<1x256xf32>
    %555 = arith.addf %548, %554 : vector<1x256xf32>
    %c54 = arith.constant 54 : index
    %556 = memref.load %arg2[%c54] : memref<98xf32, #tpu.memory_space<smem>>
    %557 = vector.extract_strided_slice %5 {offsets = [0, 0], sizes = [1, 46], strides = [1, 1]} : vector<1x51xf32> to vector<1x46xf32>
    %558 = vector.extract_strided_slice %506 {offsets = [0, 0], sizes = [1, 210], strides = [1, 1]} : vector<1x256xf32> to vector<1x210xf32>
    %559 = tpu.concatenate %557, %558 in 1 : vector<1x46xf32>, vector<1x210xf32> -> vector<1x256xf32>
    %560 = vector.broadcast %556 : f32 to vector<1x256xf32>
    %561 = arith.mulf %560, %559 : vector<1x256xf32>
    %562 = arith.addf %555, %561 : vector<1x256xf32>
    %c61 = arith.constant 61 : index
    %563 = memref.load %arg2[%c61] : memref<98xf32, #tpu.memory_space<smem>>
    %564 = vector.extract_strided_slice %5 {offsets = [0, 0], sizes = [1, 30], strides = [1, 1]} : vector<1x51xf32> to vector<1x30xf32>
    %565 = vector.extract_strided_slice %506 {offsets = [0, 0], sizes = [1, 226], strides = [1, 1]} : vector<1x256xf32> to vector<1x226xf32>
    %566 = tpu.concatenate %564, %565 in 1 : vector<1x30xf32>, vector<1x226xf32> -> vector<1x256xf32>
    %567 = vector.broadcast %563 : f32 to vector<1x256xf32>
    %568 = arith.mulf %567, %566 : vector<1x256xf32>
    %569 = arith.addf %562, %568 : vector<1x256xf32>
    %c68 = arith.constant 68 : index
    %570 = memref.load %arg2[%c68] : memref<98xf32, #tpu.memory_space<smem>>
    %571 = vector.extract_strided_slice %5 {offsets = [0, 0], sizes = [1, 14], strides = [1, 1]} : vector<1x51xf32> to vector<1x14xf32>
    %572 = vector.extract_strided_slice %506 {offsets = [0, 0], sizes = [1, 242], strides = [1, 1]} : vector<1x256xf32> to vector<1x242xf32>
    %573 = tpu.concatenate %571, %572 in 1 : vector<1x14xf32>, vector<1x242xf32> -> vector<1x256xf32>
    %574 = vector.broadcast %570 : f32 to vector<1x256xf32>
    %575 = arith.mulf %574, %573 : vector<1x256xf32>
    %576 = arith.addf %569, %575 : vector<1x256xf32>
    %c75 = arith.constant 75 : index
    %577 = memref.load %arg2[%c75] : memref<98xf32, #tpu.memory_space<smem>>
    %578 = vector.extract_strided_slice %506 {offsets = [0, 2], sizes = [1, 254], strides = [1, 1]} : vector<1x256xf32> to vector<1x254xf32>
    %579 = vector.extract_strided_slice %5 {offsets = [0, 0], sizes = [1, 2], strides = [1, 1]} : vector<1x51xf32> to vector<1x2xf32>
    %580 = tpu.concatenate %578, %579 in 1 : vector<1x254xf32>, vector<1x2xf32> -> vector<1x256xf32>
    %581 = vector.broadcast %577 : f32 to vector<1x256xf32>
    %582 = arith.mulf %581, %580 : vector<1x256xf32>
    %583 = arith.addf %576, %582 : vector<1x256xf32>
    %c82 = arith.constant 82 : index
    %584 = memref.load %arg2[%c82] : memref<98xf32, #tpu.memory_space<smem>>
    %585 = vector.extract_strided_slice %506 {offsets = [0, 18], sizes = [1, 238], strides = [1, 1]} : vector<1x256xf32> to vector<1x238xf32>
    %586 = vector.extract_strided_slice %5 {offsets = [0, 0], sizes = [1, 18], strides = [1, 1]} : vector<1x51xf32> to vector<1x18xf32>
    %587 = tpu.concatenate %585, %586 in 1 : vector<1x238xf32>, vector<1x18xf32> -> vector<1x256xf32>
    %588 = vector.broadcast %584 : f32 to vector<1x256xf32>
    %589 = arith.mulf %588, %587 : vector<1x256xf32>
    %590 = arith.addf %583, %589 : vector<1x256xf32>
    %c89 = arith.constant 89 : index
    %591 = memref.load %arg2[%c89] : memref<98xf32, #tpu.memory_space<smem>>
    %592 = vector.extract_strided_slice %506 {offsets = [0, 34], sizes = [1, 222], strides = [1, 1]} : vector<1x256xf32> to vector<1x222xf32>
    %593 = vector.extract_strided_slice %5 {offsets = [0, 0], sizes = [1, 34], strides = [1, 1]} : vector<1x51xf32> to vector<1x34xf32>
    %594 = tpu.concatenate %592, %593 in 1 : vector<1x222xf32>, vector<1x34xf32> -> vector<1x256xf32>
    %595 = vector.broadcast %591 : f32 to vector<1x256xf32>
    %596 = arith.mulf %595, %594 : vector<1x256xf32>
    %597 = arith.addf %590, %596 : vector<1x256xf32>
    %c96 = arith.constant 96 : index
    %598 = memref.load %arg2[%c96] : memref<98xf32, #tpu.memory_space<smem>>
    %599 = vector.extract_strided_slice %506 {offsets = [0, 50], sizes = [1, 206], strides = [1, 1]} : vector<1x256xf32> to vector<1x206xf32>
    %600 = vector.extract_strided_slice %5 {offsets = [0, 0], sizes = [1, 50], strides = [1, 1]} : vector<1x51xf32> to vector<1x50xf32>
    %601 = tpu.concatenate %599, %600 in 1 : vector<1x206xf32>, vector<1x50xf32> -> vector<1x256xf32>
    %602 = vector.broadcast %598 : f32 to vector<1x256xf32>
    %603 = arith.mulf %602, %601 : vector<1x256xf32>
    %604 = arith.addf %597, %603 : vector<1x256xf32>
    %c6 = arith.constant 6 : index
    %c0_19 = arith.constant 0 : index
    %605 = vector.load %arg3[%c6, %c0_19] : memref<7x256xf32, #tpu.memory_space<vmem>>, vector<1x256xf32>
    %606 = arith.mulf %3, %605 : vector<1x256xf32>
    %607 = arith.mulf %4, %605 : vector<1x256xf32>
    %c6_20 = arith.constant 6 : index
    %608 = memref.load %arg2[%c6_20] : memref<98xf32, #tpu.memory_space<smem>>
    %609 = vector.extract_strided_slice %5 {offsets = [0, 0], sizes = [1, 45], strides = [1, 1]} : vector<1x51xf32> to vector<1x45xf32>
    %610 = vector.extract_strided_slice %606 {offsets = [0, 0], sizes = [1, 211], strides = [1, 1]} : vector<1x256xf32> to vector<1x211xf32>
    %611 = tpu.concatenate %609, %610 in 1 : vector<1x45xf32>, vector<1x211xf32> -> vector<1x256xf32>
    %612 = vector.broadcast %608 : f32 to vector<1x256xf32>
    %613 = arith.mulf %612, %611 : vector<1x256xf32>
    %614 = arith.addf %604, %613 : vector<1x256xf32>
    %c13 = arith.constant 13 : index
    %615 = memref.load %arg2[%c13] : memref<98xf32, #tpu.memory_space<smem>>
    %616 = vector.extract_strided_slice %5 {offsets = [0, 0], sizes = [1, 29], strides = [1, 1]} : vector<1x51xf32> to vector<1x29xf32>
    %617 = vector.extract_strided_slice %606 {offsets = [0, 0], sizes = [1, 227], strides = [1, 1]} : vector<1x256xf32> to vector<1x227xf32>
    %618 = tpu.concatenate %616, %617 in 1 : vector<1x29xf32>, vector<1x227xf32> -> vector<1x256xf32>
    %619 = vector.broadcast %615 : f32 to vector<1x256xf32>
    %620 = arith.mulf %619, %618 : vector<1x256xf32>
    %621 = arith.addf %614, %620 : vector<1x256xf32>
    %c20 = arith.constant 20 : index
    %622 = memref.load %arg2[%c20] : memref<98xf32, #tpu.memory_space<smem>>
    %623 = vector.extract_strided_slice %5 {offsets = [0, 0], sizes = [1, 13], strides = [1, 1]} : vector<1x51xf32> to vector<1x13xf32>
    %624 = vector.extract_strided_slice %606 {offsets = [0, 0], sizes = [1, 243], strides = [1, 1]} : vector<1x256xf32> to vector<1x243xf32>
    %625 = tpu.concatenate %623, %624 in 1 : vector<1x13xf32>, vector<1x243xf32> -> vector<1x256xf32>
    %626 = vector.broadcast %622 : f32 to vector<1x256xf32>
    %627 = arith.mulf %626, %625 : vector<1x256xf32>
    %628 = arith.addf %621, %627 : vector<1x256xf32>
    %c27 = arith.constant 27 : index
    %629 = memref.load %arg2[%c27] : memref<98xf32, #tpu.memory_space<smem>>
    %630 = vector.extract_strided_slice %606 {offsets = [0, 3], sizes = [1, 253], strides = [1, 1]} : vector<1x256xf32> to vector<1x253xf32>
    %631 = vector.extract_strided_slice %5 {offsets = [0, 0], sizes = [1, 3], strides = [1, 1]} : vector<1x51xf32> to vector<1x3xf32>
    %632 = tpu.concatenate %630, %631 in 1 : vector<1x253xf32>, vector<1x3xf32> -> vector<1x256xf32>
    %633 = vector.broadcast %629 : f32 to vector<1x256xf32>
    %634 = arith.mulf %633, %632 : vector<1x256xf32>
    %635 = arith.addf %628, %634 : vector<1x256xf32>
    %c34 = arith.constant 34 : index
    %636 = memref.load %arg2[%c34] : memref<98xf32, #tpu.memory_space<smem>>
    %637 = vector.extract_strided_slice %606 {offsets = [0, 19], sizes = [1, 237], strides = [1, 1]} : vector<1x256xf32> to vector<1x237xf32>
    %638 = vector.extract_strided_slice %5 {offsets = [0, 0], sizes = [1, 19], strides = [1, 1]} : vector<1x51xf32> to vector<1x19xf32>
    %639 = tpu.concatenate %637, %638 in 1 : vector<1x237xf32>, vector<1x19xf32> -> vector<1x256xf32>
    %640 = vector.broadcast %636 : f32 to vector<1x256xf32>
    %641 = arith.mulf %640, %639 : vector<1x256xf32>
    %642 = arith.addf %635, %641 : vector<1x256xf32>
    %c41 = arith.constant 41 : index
    %643 = memref.load %arg2[%c41] : memref<98xf32, #tpu.memory_space<smem>>
    %644 = vector.extract_strided_slice %606 {offsets = [0, 35], sizes = [1, 221], strides = [1, 1]} : vector<1x256xf32> to vector<1x221xf32>
    %645 = vector.extract_strided_slice %5 {offsets = [0, 0], sizes = [1, 35], strides = [1, 1]} : vector<1x51xf32> to vector<1x35xf32>
    %646 = tpu.concatenate %644, %645 in 1 : vector<1x221xf32>, vector<1x35xf32> -> vector<1x256xf32>
    %647 = vector.broadcast %643 : f32 to vector<1x256xf32>
    %648 = arith.mulf %647, %646 : vector<1x256xf32>
    %649 = arith.addf %642, %648 : vector<1x256xf32>
    %c48 = arith.constant 48 : index
    %650 = memref.load %arg2[%c48] : memref<98xf32, #tpu.memory_space<smem>>
    %651 = vector.extract_strided_slice %606 {offsets = [0, 51], sizes = [1, 205], strides = [1, 1]} : vector<1x256xf32> to vector<1x205xf32>
    %652 = tpu.concatenate %651, %5 in 1 : vector<1x205xf32>, vector<1x51xf32> -> vector<1x256xf32>
    %653 = vector.broadcast %650 : f32 to vector<1x256xf32>
    %654 = arith.mulf %653, %652 : vector<1x256xf32>
    %655 = arith.addf %649, %654 : vector<1x256xf32>
    %c55 = arith.constant 55 : index
    %656 = memref.load %arg2[%c55] : memref<98xf32, #tpu.memory_space<smem>>
    %657 = vector.extract_strided_slice %5 {offsets = [0, 0], sizes = [1, 45], strides = [1, 1]} : vector<1x51xf32> to vector<1x45xf32>
    %658 = vector.extract_strided_slice %607 {offsets = [0, 0], sizes = [1, 211], strides = [1, 1]} : vector<1x256xf32> to vector<1x211xf32>
    %659 = tpu.concatenate %657, %658 in 1 : vector<1x45xf32>, vector<1x211xf32> -> vector<1x256xf32>
    %660 = vector.broadcast %656 : f32 to vector<1x256xf32>
    %661 = arith.mulf %660, %659 : vector<1x256xf32>
    %662 = arith.addf %655, %661 : vector<1x256xf32>
    %c62 = arith.constant 62 : index
    %663 = memref.load %arg2[%c62] : memref<98xf32, #tpu.memory_space<smem>>
    %664 = vector.extract_strided_slice %5 {offsets = [0, 0], sizes = [1, 29], strides = [1, 1]} : vector<1x51xf32> to vector<1x29xf32>
    %665 = vector.extract_strided_slice %607 {offsets = [0, 0], sizes = [1, 227], strides = [1, 1]} : vector<1x256xf32> to vector<1x227xf32>
    %666 = tpu.concatenate %664, %665 in 1 : vector<1x29xf32>, vector<1x227xf32> -> vector<1x256xf32>
    %667 = vector.broadcast %663 : f32 to vector<1x256xf32>
    %668 = arith.mulf %667, %666 : vector<1x256xf32>
    %669 = arith.addf %662, %668 : vector<1x256xf32>
    %c69 = arith.constant 69 : index
    %670 = memref.load %arg2[%c69] : memref<98xf32, #tpu.memory_space<smem>>
    %671 = vector.extract_strided_slice %5 {offsets = [0, 0], sizes = [1, 13], strides = [1, 1]} : vector<1x51xf32> to vector<1x13xf32>
    %672 = vector.extract_strided_slice %607 {offsets = [0, 0], sizes = [1, 243], strides = [1, 1]} : vector<1x256xf32> to vector<1x243xf32>
    %673 = tpu.concatenate %671, %672 in 1 : vector<1x13xf32>, vector<1x243xf32> -> vector<1x256xf32>
    %674 = vector.broadcast %670 : f32 to vector<1x256xf32>
    %675 = arith.mulf %674, %673 : vector<1x256xf32>
    %676 = arith.addf %669, %675 : vector<1x256xf32>
    %c76 = arith.constant 76 : index
    %677 = memref.load %arg2[%c76] : memref<98xf32, #tpu.memory_space<smem>>
    %678 = vector.extract_strided_slice %607 {offsets = [0, 3], sizes = [1, 253], strides = [1, 1]} : vector<1x256xf32> to vector<1x253xf32>
    %679 = vector.extract_strided_slice %5 {offsets = [0, 0], sizes = [1, 3], strides = [1, 1]} : vector<1x51xf32> to vector<1x3xf32>
    %680 = tpu.concatenate %678, %679 in 1 : vector<1x253xf32>, vector<1x3xf32> -> vector<1x256xf32>
    %681 = vector.broadcast %677 : f32 to vector<1x256xf32>
    %682 = arith.mulf %681, %680 : vector<1x256xf32>
    %683 = arith.addf %676, %682 : vector<1x256xf32>
    %c83 = arith.constant 83 : index
    %684 = memref.load %arg2[%c83] : memref<98xf32, #tpu.memory_space<smem>>
    %685 = vector.extract_strided_slice %607 {offsets = [0, 19], sizes = [1, 237], strides = [1, 1]} : vector<1x256xf32> to vector<1x237xf32>
    %686 = vector.extract_strided_slice %5 {offsets = [0, 0], sizes = [1, 19], strides = [1, 1]} : vector<1x51xf32> to vector<1x19xf32>
    %687 = tpu.concatenate %685, %686 in 1 : vector<1x237xf32>, vector<1x19xf32> -> vector<1x256xf32>
    %688 = vector.broadcast %684 : f32 to vector<1x256xf32>
    %689 = arith.mulf %688, %687 : vector<1x256xf32>
    %690 = arith.addf %683, %689 : vector<1x256xf32>
    %c90 = arith.constant 90 : index
    %691 = memref.load %arg2[%c90] : memref<98xf32, #tpu.memory_space<smem>>
    %692 = vector.extract_strided_slice %607 {offsets = [0, 35], sizes = [1, 221], strides = [1, 1]} : vector<1x256xf32> to vector<1x221xf32>
    %693 = vector.extract_strided_slice %5 {offsets = [0, 0], sizes = [1, 35], strides = [1, 1]} : vector<1x51xf32> to vector<1x35xf32>
    %694 = tpu.concatenate %692, %693 in 1 : vector<1x221xf32>, vector<1x35xf32> -> vector<1x256xf32>
    %695 = vector.broadcast %691 : f32 to vector<1x256xf32>
    %696 = arith.mulf %695, %694 : vector<1x256xf32>
    %697 = arith.addf %690, %696 : vector<1x256xf32>
    %c97 = arith.constant 97 : index
    %698 = memref.load %arg2[%c97] : memref<98xf32, #tpu.memory_space<smem>>
    %699 = vector.extract_strided_slice %607 {offsets = [0, 51], sizes = [1, 205], strides = [1, 1]} : vector<1x256xf32> to vector<1x205xf32>
    %700 = tpu.concatenate %699, %5 in 1 : vector<1x205xf32>, vector<1x51xf32> -> vector<1x256xf32>
    %701 = vector.broadcast %698 : f32 to vector<1x256xf32>
    %702 = arith.mulf %701, %700 : vector<1x256xf32>
    %703 = arith.addf %697, %702 : vector<1x256xf32>
    %704 = arith.negf %703 : vector<1x256xf32>
    %705 = math.exp %704 : vector<1x256xf32>
    %cst_21 = arith.constant 1.000000e+00 : f32
    %706 = vector.broadcast %cst_21 : f32 to vector<1x256xf32>
    %707 = arith.addf %706, %705 : vector<1x256xf32>
    %708 = arith.divf %706, %707 : vector<1x256xf32>
    %c0_22 = arith.constant 0 : index
    %c0_23 = arith.constant 0 : index
    %c0_24 = arith.constant 0 : index
    %709 = vector.load %arg4[%c0_22, %c0_23, %c0_24] : memref<1x1x256xf32, #tpu.memory_space<vmem>>, vector<1x1x256xf32>
    %710 = vector.shape_cast %709 : vector<1x1x256xf32> to vector<1x256xf32>
    %711 = vector.shape_cast %708 : vector<1x256xf32> to vector<1x1x256xf32>
    tpu.vector_store %arg4[%c0_22, %c0_23, %c0_24], %711 {strides = array<i32>} : memref<1x1x256xf32, #tpu.memory_space<vmem>>, vector<1x1x256xf32>,
    return
  }
  func.func @transform_0(%arg0: i32) -> (i32, i32, i32) {
    %c0_i32 = arith.constant 0 : i32
    %c0_i32_0 = arith.constant 0 : i32
    %c0_i32_1 = arith.constant 0 : i32
    return %arg0, %c0_i32, %c0_i32_0 : i32, i32, i32
  }
  func.func @transform_1(%arg0: i32) -> i32 {
    %c0_i32 = arith.constant 0 : i32
    %c0_i32_0 = arith.constant 0 : i32
    return %c0_i32 : i32
  }
  func.func @transform_2(%arg0: i32) -> (i32, i32) {
    %c0_i32 = arith.constant 0 : i32
    %c0_i32_0 = arith.constant 0 : i32
    %c0_i32_1 = arith.constant 0 : i32
    return %c0_i32, %c0_i32_0 : i32, i32
  }
  func.func @transform_3(%arg0: i32) -> (i32, i32, i32) {
    %c0_i32 = arith.constant 0 : i32
    %c0_i32_0 = arith.constant 0 : i32
    %c0_i32_1 = arith.constant 0 : i32
    return %arg0, %c0_i32, %c0_i32_0 : i32, i32, i32
  }
}

</mosaic_0001>

<llo_original>
// kernel: tpu_custom_call.1
$region0: #{tpu_custom_call.1}
  #allocation0 [shape = 'u32[]', space=smem, size = 0x4, offset = 0x4, fixed_abs, tag = 'smem constant byte address 0x4 - core index']
  #allocation1 [shape = 'u32[72,128]{1,0:T(1,128)}', space=vmem, size = 0x9000, scoped, tag = 'internal scratch']
  %s0 = inlined_call_operand.hbm [shape: f32[2,4,256], index: 0, kind: input, shape index: {}]
  %s1 = inlined_call_operand.hbm [shape: f32[98], index: 1, kind: input, shape index: {}]
  %s2 = inlined_call_operand.hbm [shape: f32[7,256], index: 2, kind: input, shape index: {}]
  %s3 = inlined_call_operand.hbm [shape: f32[2,1,256], index: 3, kind: output, shape index: {}]
  %s4 = sld [smem:[#allocation0]]
  $region57: #{tpu_custom_call.1} parent=0
    _
  %s6 = ssub.s32 1, %s4
  %s7 = scalar_select 0, %s6, %s4
  $region1: #{tpu_custom_call.1} parent=0
    #allocation2 [shape = 'u8[8192]{0}', space=vmem, size = 0x2000, scoped, tag = 'input window, operand 0']
    #allocation3 [shape = 's32[2]{0}', space=sflag, size = 0x8, scoped, tag = 'scoped memory for tpu_custom_call.1']
    #allocation4 [shape = 's32[2]{0}', space=sflag, size = 0x8, scoped, tag = 'scoped memory for tpu_custom_call.1']
    #allocation5 [shape = 's32[2]{0}', space=sflag, size = 0x8, scoped, tag = 'scoped memory for tpu_custom_call.1']
    #allocation6 [shape = 'u8[512]{0}', space=smem, size = 0x200, scoped, tag = 'input window, operand 1, single buffered']
    #allocation7 [shape = 'u8[8192]{0}', space=vmem, size = 0x2000, scoped, tag = 'input window, operand 2, single buffered']
    #allocation8 [shape = 's32[1]{0}', space=sflag, size = 0x4, scoped, tag = 'scoped memory for tpu_custom_call.1']
    #allocation9 [shape = 'u8[2048]{0}', space=vmem, size = 0x800, scoped, tag = 'output window, operand 0']
    %8 = vsyncpa [#allocation3], 0
    %s9 = scalar_lea.sflag [#allocation3], 1
    %10 = vsyncpa %s9, 0
    %11 = vsyncpa [#allocation5], 0
    %12 = vsyncpa [#allocation8], 0
    %13 = vsyncpa [#allocation4], 0
    %s14 = scalar_lea.sflag [#allocation4], 1
    %15 = vsyncpa %s14, 0
    loop: start=0, step=1, limit=4
    $region2: #{tpu_custom_call.1} parent=1 // loop_pre_header
      _
    $region3: #{tpu_custom_call.1} parent=1 // loop_header
      %s17 = sphi 0, %s21
      %p18 = scmp.ge.s32.totalorder %s17, 4
      %s27 = sphi 0, %s29
      %s30 = sphi 0, %s27
      %s31 = sphi 0, %s30
      %s47 = sphi 0, %s31
      %s51 = sphi 0, %s51
      %s53 = sphi 0, %s51
      %s54 = sphi 0, %s53
      %s68 = sphi 0, %s54
      %s72 = sphi 0, %s72
      %s74 = sphi 0, %s72
      %s75 = sphi 0, %s74
      %s89 = sphi 0, %s75
      %s95 = sphi 0, %s97
      %s98 = sphi 0, %s95
      %s99 = sphi 0, %s98
      %s115 = sphi 0, %s99
    $region4: #{tpu_custom_call.1} parent=1 // loop_header_branch
      %20 = sbr.rel (%p18) target = $region8
    $region5: #{tpu_custom_call.1} parent=1 // loop_body
      %s22 = ssub.s32 %s17, 1
      %s23 = ssub.s32 %s17, 2
      %s24 = sadd.s32 %s17, 1
      %s25 = ssub.s32 %s17, %s24
      %p26 = scmp.eq.s32.totalorder %s25, 0
      %s28 = sadd.s32 %s27, 1
      %s29 = scalar_select %p26, %s27, %s28
      %p32 = pneg %p26
      %p33 = scmp.eq.s32.totalorder %s17, 1
      %p34 = por %p32, %p33
      %p35 = scmp.ne.s32.totalorder %s27, %s30
      %p36 = scmp.eq.s32.totalorder %s17, 0
      %p37 = por %p35, %p36
      %p38 = scmp.ne.s32.totalorder %s27, %s30
      %p39 = scmp.eq.s32.totalorder %s22, 1
      %p40 = por %p38, %p39
      %p41 = scmp.ne.s32.totalorder %s30, %s31
      %p42 = scmp.eq.s32.totalorder %s22, 0
      %p43 = por %p41, %p42
      %p44 = scmp.ne.s32.totalorder %s30, %s31
      %p45 = scmp.eq.s32.totalorder %s23, 1
      %p46 = por %p44, %p45
      %p48 = scmp.ne.s32.totalorder %s31, %s47
      %p49 = scmp.eq.s32.totalorder %s23, 0
      %p50 = por %p48, %p49
      %s52 = sadd.s32 %s51, 1
      %p55 = scmp.eq.s32.totalorder %s17, 1
      %p56 = scmp.ne.s32.totalorder %s51, %s53
      %p57 = scmp.eq.s32.totalorder %s17, 0
      %p58 = por %p56, %p57
      %p59 = scmp.ne.s32.totalorder %s51, %s53
      %p60 = scmp.eq.s32.totalorder %s22, 1
      %p61 = por %p59, %p60
      %p62 = scmp.ne.s32.totalorder %s53, %s54
      %p63 = scmp.eq.s32.totalorder %s22, 0
      %p64 = por %p62, %p63
      %p65 = scmp.ne.s32.totalorder %s53, %s54
      %p66 = scmp.eq.s32.totalorder %s23, 1
      %p67 = por %p65, %p66
      %p69 = scmp.ne.s32.totalorder %s54, %s68
      %p70 = scmp.eq.s32.totalorder %s23, 0
      %p71 = por %p69, %p70
      %s73 = sadd.s32 %s72, 1
      %p76 = scmp.eq.s32.totalorder %s17, 1
      %p77 = scmp.ne.s32.totalorder %s72, %s74
      %p78 = scmp.eq.s32.totalorder %s17, 0
      %p79 = por %p77, %p78
      %p80 = scmp.ne.s32.totalorder %s72, %s74
      %p81 = scmp.eq.s32.totalorder %s22, 1
      %p82 = por %p80, %p81
      %p83 = scmp.ne.s32.totalorder %s74, %s75
      %p84 = scmp.eq.s32.totalorder %s22, 0
      %p85 = por %p83, %p84
      %p86 = scmp.ne.s32.totalorder %s74, %s75
      %p87 = scmp.eq.s32.totalorder %s23, 1
      %p88 = por %p86, %p87
      %p90 = scmp.ne.s32.totalorder %s75, %s89
      %p91 = scmp.eq.s32.totalorder %s23, 0
      %p92 = por %p90, %p91
      %s93 = ssub.s32 %s17, %s24
      %p94 = scmp.eq.s32.totalorder %s93, 0
      %s96 = sadd.s32 %s95, 1
      %s97 = scalar_select %p94, %s95, %s96
      %p100 = pneg %p94
      %p101 = scmp.eq.s32.totalorder %s17, 1
      %p102 = por %p100, %p101
      %p103 = scmp.ne.s32.totalorder %s95, %s98
      %p104 = scmp.eq.s32.totalorder %s17, 0
      %p105 = por %p103, %p104
      %p106 = scmp.ne.s32.totalorder %s95, %s98
      %p107 = scmp.eq.s32.totalorder %s22, 1
      %p108 = por %p106, %p107
      %p109 = scmp.ne.s32.totalorder %s98, %s99
      %p110 = scmp.eq.s32.totalorder %s22, 0
      %p111 = por %p109, %p110
      %p112 = scmp.ne.s32.totalorder %s98, %s99
      %p113 = scmp.eq.s32.totalorder %s23, 1
      %p114 = por %p112, %p113
      %p116 = scmp.ne.s32.totalorder %s99, %s115
      %p117 = scmp.eq.s32.totalorder %s23, 0
      %p118 = por %p116, %p117
      %p119 = scmp.le.s32.totalorder 1, %s17
      %p120 = scmp.lt.s32.totalorder %s17, 3
      %p121 = pnand %p119, %p120
      %p122 = pneg %p121
      // Predicated region
      $region9: #{tpu_custom_call.1} parent=5 // pred_check
        _
      $region10: #{tpu_custom_call.1} parent=5 // pred_check_branch
        %124 = sbr.rel (%p121) target = $region12
      $region11: #{tpu_custom_call.1} parent=5 // pred_region
        %s125 = ssub.s32 %s17, 1
        // Predicated region
        $region13: #{tpu_custom_call.1} parent=11 // pred_check
          %p126 = pneg %p64
        $region14: #{tpu_custom_call.1} parent=11 // pred_check_branch
          %128 = sbr.rel (%p126) target = $region16
        $region15: #{tpu_custom_call.1} parent=11 // pred_region
          %130 = vsyncadd [#allocation5], 0
          %s132 = sshll.u32 %s1, 4
          %s133 = int_to_ptr.hbm [resolvable:$true] %s132
          %135 = dma.hbm_to_smem %s133, 16, [#allocation6], [#allocation5]
        $region16: #{tpu_custom_call.1} parent=11 // pred_fallthru
          _
        // Predicated region
        $region17: #{tpu_custom_call.1} parent=11 // pred_check
          %p136 = pneg %p85
        $region18: #{tpu_custom_call.1} parent=11 // pred_check_branch
          %138 = sbr.rel (%p136) target = $region20
        $region19: #{tpu_custom_call.1} parent=11 // pred_region
          %140 = vsyncadd [#allocation8], 0
          %s142 = sshll.u32 %s2, 4
          %s143 = int_to_ptr.hbm [resolvable:$true] %s142
          %s144 = sshll.u32 [#allocation7], 4
          %s145 = int_to_ptr.vmem [resolvable:$true] %s144
          %147 = dma.hbm_to_vmem [thread:$0]  %s143, 256, %s145, [#allocation8]
        $region20: #{tpu_custom_call.1} parent=11 // pred_fallthru
          _
      $region12: #{tpu_custom_call.1} parent=5 // pred_fallthru
        _
      %p148 = scmp.lt.s32.totalorder %s17, 2
      // Predicated region
      $region21: #{tpu_custom_call.1} parent=5 // pred_check
        %p149 = pneg %p148
      $region22: #{tpu_custom_call.1} parent=5 // pred_check_branch
        %151 = sbr.rel (%p149) target = $region24
      $region23: #{tpu_custom_call.1} parent=5 // pred_region
        // Predicated region
        $region25: #{tpu_custom_call.1} parent=23 // pred_check
          %p152 = pneg %p37
        $region26: #{tpu_custom_call.1} parent=23 // pred_check_branch
          %154 = sbr.rel (%p152) target = $region28
        $region27: #{tpu_custom_call.1} parent=23 // pred_region
          %s155 = sand.u32 %s27, 1
          %s156 = scalar_lea.sflag [#allocation3], %s155
          %s157 = sand.u32 %s27, 1
          %s158 = smul.addr %s157, 8
          %s159 = scalar_lea.vmem [#allocation2], %s158
          %161 = vsyncadd %s156, 0
          %s162 = smul.addr %s17, 2
          %s163 = smul.addr %s162, 4
          %s164 = scalar_lea.hbm %s0, %s163
          %s166 = sshll.u32 %s164, 4
          %s167 = int_to_ptr.hbm [resolvable:$true] %s166
          %s168 = sshll.u32 %s159, 4
          %s169 = int_to_ptr.vmem [resolvable:$true] %s168
          %171 = dma.hbm_to_vmem [thread:$0]  %s167, 128, %s169, %s156
        $region28: #{tpu_custom_call.1} parent=23 // pred_fallthru
          _
      $region24: #{tpu_custom_call.1} parent=5 // pred_fallthru
        _
      %p172 = scmp.le.s32.totalorder 1, %s17
      %p173 = scmp.lt.s32.totalorder %s17, 3
      %p174 = pnand %p172, %p173
      %p175 = pneg %p174
      // Predicated region
      $region29: #{tpu_custom_call.1} parent=5 // pred_check
        _
      $region30: #{tpu_custom_call.1} parent=5 // pred_check_branch
        %177 = sbr.rel (%p174) target = $region32
      $region31: #{tpu_custom_call.1} parent=5 // pred_region
        %s178 = ssub.s32 %s17, 1
        %s179 = sand.u32 %s30, 1
        %s180 = scalar_lea.sflag [#allocation3], %s179
        %s181 = sand.u32 %s30, 1
        %s182 = smul.addr %s181, 8
        %s183 = scalar_lea.vmem [#allocation2], %s182
        // Predicated region
        $region33: #{tpu_custom_call.1} parent=31 // pred_check
          %p184 = pneg %p43
        $region34: #{tpu_custom_call.1} parent=31 // pred_check_branch
          %186 = sbr.rel (%p184) target = $region36
        $region35: #{tpu_custom_call.1} parent=31 // pred_region
          %188 = dma.done %s180, 128
        $region36: #{tpu_custom_call.1} parent=31 // pred_fallthru
          _
        // Predicated region
        $region37: #{tpu_custom_call.1} parent=31 // pred_check
          %p189 = pneg %p64
        $region38: #{tpu_custom_call.1} parent=31 // pred_check_branch
          %191 = sbr.rel (%p189) target = $region40
        $region39: #{tpu_custom_call.1} parent=31 // pred_region
          %193 = dma.done [#allocation5], 16
        $region40: #{tpu_custom_call.1} parent=31 // pred_fallthru
          _
        // Predicated region
        $region41: #{tpu_custom_call.1} parent=31 // pred_check
          %p194 = pneg %p85
        $region42: #{tpu_custom_call.1} parent=31 // pred_check_branch
          %196 = sbr.rel (%p194) target = $region44
        $region43: #{tpu_custom_call.1} parent=31 // pred_region
          %198 = dma.done [#allocation8], 256
        $region44: #{tpu_custom_call.1} parent=31 // pred_fallthru
          _
        %199 = sfence
        %s200 = sand.u32 %s30, 1
        %s201 = scalar_lea.sflag [#allocation3], %s200
        %s202 = sand.u32 %s30, 1
        %s203 = smul.addr %s202, 8
        %s204 = scalar_lea.vmem [#allocation2], %s203
        %p205 = pneg %p43
        %p206 = pneg %p40
        %p207 = pneg %p64
        %p208 = pneg %p61
        %p209 = pneg %p85
        %p210 = pneg %p82
        %p211 = pneg %p111
        %p212 = pneg %p108
        %s213 = sand.u32 %s98, 1
        %s214 = scalar_lea.sflag [#allocation4], %s213
        %s215 = sand.u32 %s98, 1
        %s216 = smul.addr %s215, 2
        %s217 = scalar_lea.vmem [#allocation9], %s216
        %v218 = vld [vmem:[%s183] sm:$0xff]
        %220 = vst [vmem:[#allocation1] ss:$2 sm:$0xff] %v218
        %v221 = vld.sshfl [vmem:[#allocation1] sm:$0xff pattern:$0x75316420]
        %v222 = vld.sshfl [vmem:[#allocation1 + $0x8] sm:$0xff pattern:$0x75316420]
        %vm225 = vcmask 1043456
        %v226 = vsel %vm225, %v221, 0.0
        %v227 = vrot.slane %v226, 4
        %v228 = vadd.f32 %v226, %v227
        %v229 = vrot.slane %v228, 2
        %v230 = vadd.f32 %v228, %v229
        %v231 = vrot.slane %v230, 1
        %v232 = vadd.f32 %v230, %v231
        %v233 = vsel %vm225, %v222, 0.0
        %v234 = vrot.slane %v233, 4
        %v235 = vadd.f32 %v233, %v234
        %v236 = vrot.slane %v235, 2
        %v237 = vadd.f32 %v235, %v236
        %v238 = vrot.slane %v237, 1
        %v239 = vadd.f32 %v237, %v238
        %v240 = vrcp.pop 4.0
        %v241 = vmul.f32 4.0, %v240
        %v242 = vsub.f32 1.0, %v241
        %v243 = vmul.f32 %v240, %v242
        %v244 = vadd.f32 %v240, %v243
        %vm245 = vweird.f32 %v240
        %v246 = vsel %vm245, %v240, %v244
        %v247 = vmul.f32 %v232, %v246
        %v248 = vmul.f32 %v239, %v246
        %249 = vst [vmem:[#allocation1] ss:$2 sm:$0xff] %v218
        %v250 = vld.sshfl [vmem:[#allocation1] sm:$0xff pattern:$0x75316420]
        %v251 = vld.sshfl [vmem:[#allocation1 + $0x8] sm:$0xff pattern:$0x75316420]
        %v254 = vsel %vm225, %v250, -inf
        %v255 = vrot.slane %v254, 4
        %v256 = vmax.f32 %v254, %v255
        %v257 = vrot.slane %v256, 2
        %v258 = vmax.f32 %v256, %v257
        %v259 = vrot.slane %v258, 1
        %v260 = vmax.f32 %v258, %v259
        %v261 = vsel %vm225, %v251, -inf
        %v262 = vrot.slane %v261, 4
        %v263 = vmax.f32 %v261, %v262
        %v264 = vrot.slane %v263, 2
        %v265 = vmax.f32 %v263, %v264
        %v266 = vrot.slane %v265, 1
        %v267 = vmax.f32 %v265, %v266
        %v268 = vld [vmem:[#allocation7] ss:$8 sm:$0x3]
        %v270 = vperm.slane %v268, 0
        %v271 = vperm.slane %v268, 1
        %v274 = vmul.f32 %v247, %v270
        %v275 = vmul.f32 %v248, %v271
        %v276 = vmul.f32 %v260, %v270
        %v277 = vmul.f32 %v267, %v271
        %s278 = sld [smem:[#allocation6]]
        %281 = vrot.lane.b32.xlu0 %v274, 51
        %v282 = vpop.permute.xlu0 %281
        %283 = vrot.lane.b32.xlu0 %v275, 51
        %v284 = vpop.permute.xlu0 %283
        %vm285 = vcmask 416768
        %v286 = vsel %vm285, %v282, %v284
        %v289 = vsel %vm285, 0.0, %v282
        %v290 = vstv %s278
        %v291 = vmul.f32 %v290, %v289
        %v292 = vmul.f32 %v290, %v286
        %v293 = vadd.f32 %v291, 0.0
        %v294 = vadd.f32 %v292, 0.0
        %s295 = sld [smem:[#allocation6 + $0x7]]
        %296 = vrot.lane.b32.xlu0 %v274, 35
        %v297 = vpop.permute.xlu0 %296
        %298 = vrot.lane.b32.xlu0 %v275, 35
        %v299 = vpop.permute.xlu0 %298
        %vm300 = vcmask 285696
        %v301 = vsel %vm300, %v297, %v299
        %v304 = vsel %vm300, 0.0, %v297
        %v305 = vstv %s295
        %v306 = vmul.f32 %v305, %v304
        %v307 = vmul.f32 %v305, %v301
        %v308 = vadd.f32 %v293, %v306
        %v309 = vadd.f32 %v294, %v307
        %s310 = sld [smem:[#allocation6 + $0xe]]
        %311 = vrot.lane.b32.xlu0 %v274, 19
        %v312 = vpop.permute.xlu0 %311
        %313 = vrot.lane.b32.xlu0 %v275, 19
        %v314 = vpop.permute.xlu0 %313
        %vm315 = vcmask 154624
        %v316 = vsel %vm315, %v312, %v314
        %v319 = vsel %vm315, 0.0, %v312
        %v320 = vstv %s310
        %v321 = vmul.f32 %v320, %v319
        %v322 = vmul.f32 %v320, %v316
        %v323 = vadd.f32 %v308, %v321
        %v324 = vadd.f32 %v309, %v322
        %s325 = sld [smem:[#allocation6 + $0x15]]
        %326 = vrot.lane.b32.xlu0 %v274, 3
        %v327 = vpop.permute.xlu0 %326
        %328 = vrot.lane.b32.xlu0 %v275, 3
        %v329 = vpop.permute.xlu0 %328
        %vm330 = vcmask 23552
        %v331 = vsel %vm330, %v327, %v329
        %v334 = vsel %vm330, 0.0, %v327
        %v335 = vstv %s325
        %v336 = vmul.f32 %v335, %v334
        %v337 = vmul.f32 %v335, %v331
        %v338 = vadd.f32 %v323, %v336
        %v339 = vadd.f32 %v324, %v337
        %s340 = sld [smem:[#allocation6 + $0x1c]]
        %341 = vrot.lane.b32.xlu0 %v274, 115
        %v342 = vpop.permute.xlu0 %341
        %343 = vrot.lane.b32.xlu0 %v275, 115
        %v344 = vpop.permute.xlu0 %343
        %vm345 = vcmask 941056
        %v346 = vsel %vm345, %v342, %v344
        %v349 = vsel %vm345, %v344, 0.0
        %v350 = vstv %s340
        %v351 = vmul.f32 %v350, %v346
        %v352 = vmul.f32 %v350, %v349
        %v353 = vadd.f32 %v338, %v351
        %v354 = vadd.f32 %v339, %v352
        %s355 = sld [smem:[#allocation6 + $0x23]]
        %356 = vrot.lane.b32.xlu0 %v274, 99
        %v357 = vpop.permute.xlu0 %356
        %358 = vrot.lane.b32.xlu0 %v275, 99
        %v359 = vpop.permute.xlu0 %358
        %vm360 = vcmask 809984
        %v361 = vsel %vm360, %v357, %v359
        %v364 = vsel %vm360, %v359, 0.0
        %v365 = vstv %s355
        %v366 = vmul.f32 %v365, %v361
        %v367 = vmul.f32 %v365, %v364
        %v368 = vadd.f32 %v353, %v366
        %v369 = vadd.f32 %v354, %v367
        %s370 = sld [smem:[#allocation6 + $0x2a]]
        %371 = vrot.lane.b32.xlu0 %v274, 83
        %v372 = vpop.permute.xlu0 %371
        %373 = vrot.lane.b32.xlu0 %v275, 83
        %v374 = vpop.permute.xlu0 %373
        %vm375 = vcmask 678912
        %v376 = vsel %vm375, %v372, %v374
        %v379 = vsel %vm375, %v374, 0.0
        %v380 = vstv %s370
        %v381 = vmul.f32 %v380, %v376
        %v382 = vmul.f32 %v380, %v379
        %v383 = vadd.f32 %v368, %v381
        %v384 = vadd.f32 %v369, %v382
        %s385 = sld [smem:[#allocation6 + $0x31]]
        %388 = vrot.lane.b32.xlu0 %v276, 51
        %v389 = vpop.permute.xlu0 %388
        %390 = vrot.lane.b32.xlu0 %v277, 51
        %v391 = vpop.permute.xlu0 %390
        %v392 = vsel %vm285, %v389, %v391
        %v395 = vsel %vm285, 0.0, %v389
        %v396 = vstv %s385
        %v397 = vmul.f32 %v396, %v395
        %v398 = vmul.f32 %v396, %v392
        %v399 = vadd.f32 %v383, %v397
        %v400 = vadd.f32 %v384, %v398
        %s401 = sld [smem:[#allocation6 + $0x38]]
        %402 = vrot.lane.b32.xlu0 %v276, 35
        %v403 = vpop.permute.xlu0 %402
        %404 = vrot.lane.b32.xlu0 %v277, 35
        %v405 = vpop.permute.xlu0 %404
        %v406 = vsel %vm300, %v403, %v405
        %v409 = vsel %vm300, 0.0, %v403
        %v410 = vstv %s401
        %v411 = vmul.f32 %v410, %v409
        %v412 = vmul.f32 %v410, %v406
        %v413 = vadd.f32 %v399, %v411
        %v414 = vadd.f32 %v400, %v412
        %s415 = sld [smem:[#allocation6 + $0x3f]]
        %416 = vrot.lane.b32.xlu0 %v276, 19
        %v417 = vpop.permute.xlu0 %416
        %418 = vrot.lane.b32.xlu0 %v277, 19
        %v419 = vpop.permute.xlu0 %418
        %v420 = vsel %vm315, %v417, %v419
        %v423 = vsel %vm315, 0.0, %v417
        %v424 = vstv %s415
        %v425 = vmul.f32 %v424, %v423
        %v426 = vmul.f32 %v424, %v420
        %v427 = vadd.f32 %v413, %v425
        %v428 = vadd.f32 %v414, %v426
        %s429 = sld [smem:[#allocation6 + $0x46]]
        %430 = vrot.lane.b32.xlu0 %v276, 3
        %v431 = vpop.permute.xlu0 %430
        %432 = vrot.lane.b32.xlu0 %v277, 3
        %v433 = vpop.permute.xlu0 %432
        %v434 = vsel %vm330, %v431, %v433
        %v437 = vsel %vm330, 0.0, %v431
        %v438 = vstv %s429
        %v439 = vmul.f32 %v438, %v437
        %v440 = vmul.f32 %v438, %v434
        %v441 = vadd.f32 %v427, %v439
        %v442 = vadd.f32 %v428, %v440
        %s443 = sld [smem:[#allocation6 + $0x4d]]
        %444 = vrot.lane.b32.xlu0 %v276, 115
        %v445 = vpop.permute.xlu0 %444
        %446 = vrot.lane.b32.xlu0 %v277, 115
        %v447 = vpop.permute.xlu0 %446
        %v448 = vsel %vm345, %v445, %v447
        %v451 = vsel %vm345, %v447, 0.0
        %v452 = vstv %s443
        %v453 = vmul.f32 %v452, %v448
        %v454 = vmul.f32 %v452, %v451
        %v455 = vadd.f32 %v441, %v453
        %v456 = vadd.f32 %v442, %v454
        %s457 = sld [smem:[#allocation6 + $0x54]]
        %458 = vrot.lane.b32.xlu0 %v276, 99
        %v459 = vpop.permute.xlu0 %458
        %460 = vrot.lane.b32.xlu0 %v277, 99
        %v461 = vpop.permute.xlu0 %460
        %v462 = vsel %vm360, %v459, %v461
        %v465 = vsel %vm360, %v461, 0.0
        %v466 = vstv %s457
        %v467 = vmul.f32 %v466, %v462
        %v468 = vmul.f32 %v466, %v465
        %v469 = vadd.f32 %v455, %v467
        %v470 = vadd.f32 %v456, %v468
        %s471 = sld [smem:[#allocation6 + $0x5b]]
        %472 = vrot.lane.b32.xlu0 %v276, 83
        %v473 = vpop.permute.xlu0 %472
        %474 = vrot.lane.b32.xlu0 %v277, 83
        %v475 = vpop.permute.xlu0 %474
        %v476 = vsel %vm375, %v473, %v475
        %v479 = vsel %vm375, %v475, 0.0
        %v480 = vstv %s471
        %v481 = vmul.f32 %v480, %v476
        %v482 = vmul.f32 %v480, %v479
        %v483 = vadd.f32 %v469, %v481
        %v484 = vadd.f32 %v470, %v482
        %s485 = scalar_lea.vmem [#allocation7], 1
        %v486 = vld [vmem:[%s485] ss:$8 sm:$0x3]
        %v488 = vperm.slane %v486, 0
        %v489 = vperm.slane %v486, 1
        %v492 = vmul.f32 %v247, %v488
        %v493 = vmul.f32 %v248, %v489
        %v494 = vmul.f32 %v260, %v488
        %v495 = vmul.f32 %v267, %v489
        %s496 = sld [smem:[#allocation6 + $0x1]]
        %499 = vrot.lane.b32.xlu0 %v492, 50
        %v500 = vpop.permute.xlu0 %499
        %501 = vrot.lane.b32.xlu0 %v493, 50
        %v502 = vpop.permute.xlu0 %501
        %vm503 = vcmask 408576
        %v504 = vsel %vm503, %v500, %v502
        %v507 = vsel %vm503, 0.0, %v500
        %v508 = vstv %s496
        %v509 = vmul.f32 %v508, %v507
        %v510 = vmul.f32 %v508, %v504
        %v511 = vadd.f32 %v483, %v509
        %v512 = vadd.f32 %v484, %v510
        %s513 = sld [smem:[#allocation6 + $0x8]]
        %514 = vrot.lane.b32.xlu0 %v492, 34
        %v515 = vpop.permute.xlu0 %514
        %516 = vrot.lane.b32.xlu0 %v493, 34
        %v517 = vpop.permute.xlu0 %516
        %vm518 = vcmask 277504
        %v519 = vsel %vm518, %v515, %v517
        %v522 = vsel %vm518, 0.0, %v515
        %v523 = vstv %s513
        %v524 = vmul.f32 %v523, %v522
        %v525 = vmul.f32 %v523, %v519
        %v526 = vadd.f32 %v511, %v524
        %v527 = vadd.f32 %v512, %v525
        %s528 = sld [smem:[#allocation6 + $0xf]]
        %529 = vrot.lane.b32.xlu0 %v492, 18
        %v530 = vpop.permute.xlu0 %529
        %531 = vrot.lane.b32.xlu0 %v493, 18
        %v532 = vpop.permute.xlu0 %531
        %vm533 = vcmask 146432
        %v534 = vsel %vm533, %v530, %v532
        %v537 = vsel %vm533, 0.0, %v530
        %v538 = vstv %s528
        %v539 = vmul.f32 %v538, %v537
        %v540 = vmul.f32 %v538, %v534
        %v541 = vadd.f32 %v526, %v539
        %v542 = vadd.f32 %v527, %v540
        %s543 = sld [smem:[#allocation6 + $0x16]]
        %544 = vrot.lane.b32.xlu0 %v492, 2
        %v545 = vpop.permute.xlu0 %544
        %546 = vrot.lane.b32.xlu0 %v493, 2
        %v547 = vpop.permute.xlu0 %546
        %vm548 = vcmask 15360
        %v549 = vsel %vm548, %v545, %v547
        %v552 = vsel %vm548, 0.0, %v545
        %v553 = vstv %s543
        %v554 = vmul.f32 %v553, %v552
        %v555 = vmul.f32 %v553, %v549
        %v556 = vadd.f32 %v541, %v554
        %v557 = vadd.f32 %v542, %v555
        %s558 = sld [smem:[#allocation6 + $0x1d]]
        %559 = vrot.lane.b32.xlu0 %v492, 114
        %v560 = vpop.permute.xlu0 %559
        %561 = vrot.lane.b32.xlu0 %v493, 114
        %v562 = vpop.permute.xlu0 %561
        %vm563 = vcmask 932864
        %v564 = vsel %vm563, %v560, %v562
        %v567 = vsel %vm563, %v562, 0.0
        %v568 = vstv %s558
        %v569 = vmul.f32 %v568, %v564
        %v570 = vmul.f32 %v568, %v567
        %v571 = vadd.f32 %v556, %v569
        %v572 = vadd.f32 %v557, %v570
        %s573 = sld [smem:[#allocation6 + $0x24]]
        %574 = vrot.lane.b32.xlu0 %v492, 98
        %v575 = vpop.permute.xlu0 %574
        %576 = vrot.lane.b32.xlu0 %v493, 98
        %v577 = vpop.permute.xlu0 %576
        %vm578 = vcmask 801792
        %v579 = vsel %vm578, %v575, %v577
        %v582 = vsel %vm578, %v577, 0.0
        %v583 = vstv %s573
        %v584 = vmul.f32 %v583, %v579
        %v585 = vmul.f32 %v583, %v582
        %v586 = vadd.f32 %v571, %v584
        %v587 = vadd.f32 %v572, %v585
        %s588 = sld [smem:[#allocation6 + $0x2b]]
        %589 = vrot.lane.b32.xlu0 %v492, 82
        %v590 = vpop.permute.xlu0 %589
        %591 = vrot.lane.b32.xlu0 %v493, 82
        %v592 = vpop.permute.xlu0 %591
        %vm593 = vcmask 670720
        %v594 = vsel %vm593, %v590, %v592
        %v597 = vsel %vm593, %v592, 0.0
        %v598 = vstv %s588
        %v599 = vmul.f32 %v598, %v594
        %v600 = vmul.f32 %v598, %v597
        %v601 = vadd.f32 %v586, %v599
        %v602 = vadd.f32 %v587, %v600
        %s603 = sld [smem:[#allocation6 + $0x32]]
        %606 = vrot.lane.b32.xlu0 %v494, 50
        %v607 = vpop.permute.xlu0 %606
        %608 = vrot.lane.b32.xlu0 %v495, 50
        %v609 = vpop.permute.xlu0 %608
        %v610 = vsel %vm503, %v607, %v609
        %v613 = vsel %vm503, 0.0, %v607
        %v614 = vstv %s603
        %v615 = vmul.f32 %v614, %v613
        %v616 = vmul.f32 %v614, %v610
        %v617 = vadd.f32 %v601, %v615
        %v618 = vadd.f32 %v602, %v616
        %s619 = sld [smem:[#allocation6 + $0x39]]
        %620 = vrot.lane.b32.xlu0 %v494, 34
        %v621 = vpop.permute.xlu0 %620
        %622 = vrot.lane.b32.xlu0 %v495, 34
        %v623 = vpop.permute.xlu0 %622
        %v624 = vsel %vm518, %v621, %v623
        %v627 = vsel %vm518, 0.0, %v621
        %v628 = vstv %s619
        %v629 = vmul.f32 %v628, %v627
        %v630 = vmul.f32 %v628, %v624
        %v631 = vadd.f32 %v617, %v629
        %v632 = vadd.f32 %v618, %v630
        %s633 = sld [smem:[#allocation6 + $0x40]]
        %634 = vrot.lane.b32.xlu0 %v494, 18
        %v635 = vpop.permute.xlu0 %634
        %636 = vrot.lane.b32.xlu0 %v495, 18
        %v637 = vpop.permute.xlu0 %636
        %v638 = vsel %vm533, %v635, %v637
        %v641 = vsel %vm533, 0.0, %v635
        %v642 = vstv %s633
        %v643 = vmul.f32 %v642, %v641
        %v644 = vmul.f32 %v642, %v638
        %v645 = vadd.f32 %v631, %v643
        %v646 = vadd.f32 %v632, %v644
        %s647 = sld [smem:[#allocation6 + $0x47]]
        %648 = vrot.lane.b32.xlu0 %v494, 2
        %v649 = vpop.permute.xlu0 %648
        %650 = vrot.lane.b32.xlu0 %v495, 2
        %v651 = vpop.permute.xlu0 %650
        %v652 = vsel %vm548, %v649, %v651
        %v655 = vsel %vm548, 0.0, %v649
        %v656 = vstv %s647
        %v657 = vmul.f32 %v656, %v655
        %v658 = vmul.f32 %v656, %v652
        %v659 = vadd.f32 %v645, %v657
        %v660 = vadd.f32 %v646, %v658
        %s661 = sld [smem:[#allocation6 + $0x4e]]
        %662 = vrot.lane.b32.xlu0 %v494, 114
        %v663 = vpop.permute.xlu0 %662
        %664 = vrot.lane.b32.xlu0 %v495, 114
        %v665 = vpop.permute.xlu0 %664
        %v666 = vsel %vm563, %v663, %v665
        %v669 = vsel %vm563, %v665, 0.0
        %v670 = vstv %s661
        %v671 = vmul.f32 %v670, %v666
        %v672 = vmul.f32 %v670, %v669
        %v673 = vadd.f32 %v659, %v671
        %v674 = vadd.f32 %v660, %v672
        %s675 = sld [smem:[#allocation6 + $0x55]]
        %676 = vrot.lane.b32.xlu0 %v494, 98
        %v677 = vpop.permute.xlu0 %676
        %678 = vrot.lane.b32.xlu0 %v495, 98
        %v679 = vpop.permute.xlu0 %678
        %v680 = vsel %vm578, %v677, %v679
        %v683 = vsel %vm578, %v679, 0.0
        %v684 = vstv %s675
        %v685 = vmul.f32 %v684, %v680
        %v686 = vmul.f32 %v684, %v683
        %v687 = vadd.f32 %v673, %v685
        %v688 = vadd.f32 %v674, %v686
        %s689 = sld [smem:[#allocation6 + $0x5c]]
        %690 = vrot.lane.b32.xlu0 %v494, 82
        %v691 = vpop.permute.xlu0 %690
        %692 = vrot.lane.b32.xlu0 %v495, 82
        %v693 = vpop.permute.xlu0 %692
        %v694 = vsel %vm593, %v691, %v693
        %v697 = vsel %vm593, %v693, 0.0
        %v698 = vstv %s689
        %v699 = vmul.f32 %v698, %v694
        %v700 = vmul.f32 %v698, %v697
        %v701 = vadd.f32 %v687, %v699
        %v702 = vadd.f32 %v688, %v700
        %s703 = scalar_lea.vmem [#allocation7], 2
        %v704 = vld [vmem:[%s703] ss:$8 sm:$0x3]
        %v706 = vperm.slane %v704, 0
        %v707 = vperm.slane %v704, 1
        %v710 = vmul.f32 %v247, %v706
        %v711 = vmul.f32 %v248, %v707
        %v712 = vmul.f32 %v260, %v706
        %v713 = vmul.f32 %v267, %v707
        %s714 = sld [smem:[#allocation6 + $0x2]]
        %717 = vrot.lane.b32.xlu0 %v710, 49
        %v718 = vpop.permute.xlu0 %717
        %719 = vrot.lane.b32.xlu0 %v711, 49
        %v720 = vpop.permute.xlu0 %719
        %vm721 = vcmask 400384
        %v722 = vsel %vm721, %v718, %v720
        %v725 = vsel %vm721, 0.0, %v718
        %v726 = vstv %s714
        %v727 = vmul.f32 %v726, %v725
        %v728 = vmul.f32 %v726, %v722
        %v729 = vadd.f32 %v701, %v727
        %v730 = vadd.f32 %v702, %v728
        %s731 = sld [smem:[#allocation6 + $0x9]]
        %732 = vrot.lane.b32.xlu0 %v710, 33
        %v733 = vpop.permute.xlu0 %732
        %734 = vrot.lane.b32.xlu0 %v711, 33
        %v735 = vpop.permute.xlu0 %734
        %vm736 = vcmask 269312
        %v737 = vsel %vm736, %v733, %v735
        %v740 = vsel %vm736, 0.0, %v733
        %v741 = vstv %s731
        %v742 = vmul.f32 %v741, %v740
        %v743 = vmul.f32 %v741, %v737
        %v744 = vadd.f32 %v729, %v742
        %v745 = vadd.f32 %v730, %v743
        %s746 = sld [smem:[#allocation6 + $0x10]]
        %747 = vrot.lane.b32.xlu0 %v710, 17
        %v748 = vpop.permute.xlu0 %747
        %749 = vrot.lane.b32.xlu0 %v711, 17
        %v750 = vpop.permute.xlu0 %749
        %vm751 = vcmask 138240
        %v752 = vsel %vm751, %v748, %v750
        %v755 = vsel %vm751, 0.0, %v748
        %v756 = vstv %s746
        %v757 = vmul.f32 %v756, %v755
        %v758 = vmul.f32 %v756, %v752
        %v759 = vadd.f32 %v744, %v757
        %v760 = vadd.f32 %v745, %v758
        %s761 = sld [smem:[#allocation6 + $0x17]]
        %762 = vrot.lane.b32.xlu0 %v710, 1
        %v763 = vpop.permute.xlu0 %762
        %764 = vrot.lane.b32.xlu0 %v711, 1
        %v765 = vpop.permute.xlu0 %764
        %vm766 = vcmask 7168
        %v767 = vsel %vm766, %v763, %v765
        %v770 = vsel %vm766, 0.0, %v763
        %v771 = vstv %s761
        %v772 = vmul.f32 %v771, %v770
        %v773 = vmul.f32 %v771, %v767
        %v774 = vadd.f32 %v759, %v772
        %v775 = vadd.f32 %v760, %v773
        %s776 = sld [smem:[#allocation6 + $0x1e]]
        %777 = vrot.lane.b32.xlu0 %v710, 113
        %v778 = vpop.permute.xlu0 %777
        %779 = vrot.lane.b32.xlu0 %v711, 113
        %v780 = vpop.permute.xlu0 %779
        %vm781 = vcmask 924672
        %v782 = vsel %vm781, %v778, %v780
        %v785 = vsel %vm781, %v780, 0.0
        %v786 = vstv %s776
        %v787 = vmul.f32 %v786, %v782
        %v788 = vmul.f32 %v786, %v785
        %v789 = vadd.f32 %v774, %v787
        %v790 = vadd.f32 %v775, %v788
        %s791 = sld [smem:[#allocation6 + $0x25]]
        %792 = vrot.lane.b32.xlu0 %v710, 97
        %v793 = vpop.permute.xlu0 %792
        %794 = vrot.lane.b32.xlu0 %v711, 97
        %v795 = vpop.permute.xlu0 %794
        %vm796 = vcmask 793600
        %v797 = vsel %vm796, %v793, %v795
        %v800 = vsel %vm796, %v795, 0.0
        %v801 = vstv %s791
        %v802 = vmul.f32 %v801, %v797
        %v803 = vmul.f32 %v801, %v800
        %v804 = vadd.f32 %v789, %v802
        %v805 = vadd.f32 %v790, %v803
        %s806 = sld [smem:[#allocation6 + $0x2c]]
        %807 = vrot.lane.b32.xlu0 %v710, 81
        %v808 = vpop.permute.xlu0 %807
        %809 = vrot.lane.b32.xlu0 %v711, 81
        %v810 = vpop.permute.xlu0 %809
        %vm811 = vcmask 662528
        %v812 = vsel %vm811, %v808, %v810
        %v815 = vsel %vm811, %v810, 0.0
        %v816 = vstv %s806
        %v817 = vmul.f32 %v816, %v812
        %v818 = vmul.f32 %v816, %v815
        %v819 = vadd.f32 %v804, %v817
        %v820 = vadd.f32 %v805, %v818
        %s821 = sld [smem:[#allocation6 + $0x33]]
        %824 = vrot.lane.b32.xlu0 %v712, 49
        %v825 = vpop.permute.xlu0 %824
        %826 = vrot.lane.b32.xlu0 %v713, 49
        %v827 = vpop.permute.xlu0 %826
        %v828 = vsel %vm721, %v825, %v827
        %v831 = vsel %vm721, 0.0, %v825
        %v832 = vstv %s821
        %v833 = vmul.f32 %v832, %v831
        %v834 = vmul.f32 %v832, %v828
        %v835 = vadd.f32 %v819, %v833
        %v836 = vadd.f32 %v820, %v834
        %s837 = sld [smem:[#allocation6 + $0x3a]]
        %838 = vrot.lane.b32.xlu0 %v712, 33
        %v839 = vpop.permute.xlu0 %838
        %840 = vrot.lane.b32.xlu0 %v713, 33
        %v841 = vpop.permute.xlu0 %840
        %v842 = vsel %vm736, %v839, %v841
        %v845 = vsel %vm736, 0.0, %v839
        %v846 = vstv %s837
        %v847 = vmul.f32 %v846, %v845
        %v848 = vmul.f32 %v846, %v842
        %v849 = vadd.f32 %v835, %v847
        %v850 = vadd.f32 %v836, %v848
        %s851 = sld [smem:[#allocation6 + $0x41]]
        %852 = vrot.lane.b32.xlu0 %v712, 17
        %v853 = vpop.permute.xlu0 %852
        %854 = vrot.lane.b32.xlu0 %v713, 17
        %v855 = vpop.permute.xlu0 %854
        %v856 = vsel %vm751, %v853, %v855
        %v859 = vsel %vm751, 0.0, %v853
        %v860 = vstv %s851
        %v861 = vmul.f32 %v860, %v859
        %v862 = vmul.f32 %v860, %v856
        %v863 = vadd.f32 %v849, %v861
        %v864 = vadd.f32 %v850, %v862
        %s865 = sld [smem:[#allocation6 + $0x48]]
        %866 = vrot.lane.b32.xlu0 %v712, 1
        %v867 = vpop.permute.xlu0 %866
        %868 = vrot.lane.b32.xlu0 %v713, 1
        %v869 = vpop.permute.xlu0 %868
        %v870 = vsel %vm766, %v867, %v869
        %v873 = vsel %vm766, 0.0, %v867
        %v874 = vstv %s865
        %v875 = vmul.f32 %v874, %v873
        %v876 = vmul.f32 %v874, %v870
        %v877 = vadd.f32 %v863, %v875
        %v878 = vadd.f32 %v864, %v876
        %s879 = sld [smem:[#allocation6 + $0x4f]]
        %880 = vrot.lane.b32.xlu0 %v712, 113
        %v881 = vpop.permute.xlu0 %880
        %882 = vrot.lane.b32.xlu0 %v713, 113
        %v883 = vpop.permute.xlu0 %882
        %v884 = vsel %vm781, %v881, %v883
        %v887 = vsel %vm781, %v883, 0.0
        %v888 = vstv %s879
        %v889 = vmul.f32 %v888, %v884
        %v890 = vmul.f32 %v888, %v887
        %v891 = vadd.f32 %v877, %v889
        %v892 = vadd.f32 %v878, %v890
        %s893 = sld [smem:[#allocation6 + $0x56]]
        %894 = vrot.lane.b32.xlu0 %v712, 97
        %v895 = vpop.permute.xlu0 %894
        %896 = vrot.lane.b32.xlu0 %v713, 97
        %v897 = vpop.permute.xlu0 %896
        %v898 = vsel %vm796, %v895, %v897
        %v901 = vsel %vm796, %v897, 0.0
        %v902 = vstv %s893
        %v903 = vmul.f32 %v902, %v898
        %v904 = vmul.f32 %v902, %v901
        %v905 = vadd.f32 %v891, %v903
        %v906 = vadd.f32 %v892, %v904
        %s907 = sld [smem:[#allocation6 + $0x5d]]
        %908 = vrot.lane.b32.xlu0 %v712, 81
        %v909 = vpop.permute.xlu0 %908
        %910 = vrot.lane.b32.xlu0 %v713, 81
        %v911 = vpop.permute.xlu0 %910
        %v912 = vsel %vm811, %v909, %v911
        %v915 = vsel %vm811, %v911, 0.0
        %v916 = vstv %s907
        %v917 = vmul.f32 %v916, %v912
        %v918 = vmul.f32 %v916, %v915
        %v919 = vadd.f32 %v905, %v917
        %v920 = vadd.f32 %v906, %v918
        %s921 = scalar_lea.vmem [#allocation7], 3
        %v922 = vld [vmem:[%s921] ss:$8 sm:$0x3]
        %v924 = vperm.slane %v922, 0
        %v925 = vperm.slane %v922, 1
        %v928 = vmul.f32 %v247, %v924
        %v929 = vmul.f32 %v248, %v925
        %v930 = vmul.f32 %v260, %v924
        %v931 = vmul.f32 %v267, %v925
        %s932 = sld [smem:[#allocation6 + $0x3]]
        %935 = vrot.lane.b32.xlu0 %v928, 48
        %v936 = vpop.permute.xlu0 %935
        %937 = vrot.lane.b32.xlu0 %v929, 48
        %v938 = vpop.permute.xlu0 %937
        %vm939 = vcmask 392192
        %v940 = vsel %vm939, %v936, %v938
        %v943 = vsel %vm939, 0.0, %v936
        %v944 = vstv %s932
        %v945 = vmul.f32 %v944, %v943
        %v946 = vmul.f32 %v944, %v940
        %v947 = vadd.f32 %v919, %v945
        %v948 = vadd.f32 %v920, %v946
        %s949 = sld [smem:[#allocation6 + $0xa]]
        %950 = vrot.lane.b32.xlu0 %v928, 32
        %v951 = vpop.permute.xlu0 %950
        %952 = vrot.lane.b32.xlu0 %v929, 32
        %v953 = vpop.permute.xlu0 %952
        %vm954 = vcmask 261120
        %v955 = vsel %vm954, %v951, %v953
        %v958 = vsel %vm954, 0.0, %v951
        %v959 = vstv %s949
        %v960 = vmul.f32 %v959, %v958
        %v961 = vmul.f32 %v959, %v955
        %v962 = vadd.f32 %v947, %v960
        %v963 = vadd.f32 %v948, %v961
        %s964 = sld [smem:[#allocation6 + $0x11]]
        %965 = vrot.lane.b32.xlu0 %v928, 16
        %v966 = vpop.permute.xlu0 %965
        %967 = vrot.lane.b32.xlu0 %v929, 16
        %v968 = vpop.permute.xlu0 %967
        %vm969 = vcmask 130048
        %v970 = vsel %vm969, %v966, %v968
        %v973 = vsel %vm969, 0.0, %v966
        %v974 = vstv %s964
        %v975 = vmul.f32 %v974, %v973
        %v976 = vmul.f32 %v974, %v970
        %v977 = vadd.f32 %v962, %v975
        %v978 = vadd.f32 %v963, %v976
        %s979 = sld [smem:[#allocation6 + $0x18]]
        %v980 = vstv %s979
        %v981 = vmul.f32 %v980, %v928
        %v982 = vmul.f32 %v980, %v929
        %v983 = vadd.f32 %v977, %v981
        %v984 = vadd.f32 %v978, %v982
        %s985 = sld [smem:[#allocation6 + $0x1f]]
        %986 = vrot.lane.b32.xlu0 %v928, 112
        %v987 = vpop.permute.xlu0 %986
        %988 = vrot.lane.b32.xlu0 %v929, 112
        %v989 = vpop.permute.xlu0 %988
        %vm990 = vcmask 916480
        %v991 = vsel %vm990, %v987, %v989
        %v994 = vsel %vm990, %v989, 0.0
        %v995 = vstv %s985
        %v996 = vmul.f32 %v995, %v991
        %v997 = vmul.f32 %v995, %v994
        %v998 = vadd.f32 %v983, %v996
        %v999 = vadd.f32 %v984, %v997
        %s1000 = sld [smem:[#allocation6 + $0x26]]
        %1001 = vrot.lane.b32.xlu0 %v928, 96
        %v1002 = vpop.permute.xlu0 %1001
        %1003 = vrot.lane.b32.xlu0 %v929, 96
        %v1004 = vpop.permute.xlu0 %1003
        %vm1005 = vcmask 785408
        %v1006 = vsel %vm1005, %v1002, %v1004
        %v1009 = vsel %vm1005, %v1004, 0.0
        %v1010 = vstv %s1000
        %v1011 = vmul.f32 %v1010, %v1006
        %v1012 = vmul.f32 %v1010, %v1009
        %v1013 = vadd.f32 %v998, %v1011
        %v1014 = vadd.f32 %v999, %v1012
        %s1015 = sld [smem:[#allocation6 + $0x2d]]
        %1016 = vrot.lane.b32.xlu0 %v928, 80
        %v1017 = vpop.permute.xlu0 %1016
        %1018 = vrot.lane.b32.xlu0 %v929, 80
        %v1019 = vpop.permute.xlu0 %1018
        %vm1020 = vcmask 654336
        %v1021 = vsel %vm1020, %v1017, %v1019
        %v1024 = vsel %vm1020, %v1019, 0.0
        %v1025 = vstv %s1015
        %v1026 = vmul.f32 %v1025, %v1021
        %v1027 = vmul.f32 %v1025, %v1024
        %v1028 = vadd.f32 %v1013, %v1026
        %v1029 = vadd.f32 %v1014, %v1027
        %s1030 = sld [smem:[#allocation6 + $0x34]]
        %1033 = vrot.lane.b32.xlu0 %v930, 48
        %v1034 = vpop.permute.xlu0 %1033
        %1035 = vrot.lane.b32.xlu0 %v931, 48
        %v1036 = vpop.permute.xlu0 %1035
        %v1037 = vsel %vm939, %v1034, %v1036
        %v1040 = vsel %vm939, 0.0, %v1034
        %v1041 = vstv %s1030
        %v1042 = vmul.f32 %v1041, %v1040
        %v1043 = vmul.f32 %v1041, %v1037
        %v1044 = vadd.f32 %v1028, %v1042
        %v1045 = vadd.f32 %v1029, %v1043
        %s1046 = sld [smem:[#allocation6 + $0x3b]]
        %1047 = vrot.lane.b32.xlu0 %v930, 32
        %v1048 = vpop.permute.xlu0 %1047
        %1049 = vrot.lane.b32.xlu0 %v931, 32
        %v1050 = vpop.permute.xlu0 %1049
        %v1051 = vsel %vm954, %v1048, %v1050
        %v1054 = vsel %vm954, 0.0, %v1048
        %v1055 = vstv %s1046
        %v1056 = vmul.f32 %v1055, %v1054
        %v1057 = vmul.f32 %v1055, %v1051
        %v1058 = vadd.f32 %v1044, %v1056
        %v1059 = vadd.f32 %v1045, %v1057
        %s1060 = sld [smem:[#allocation6 + $0x42]]
        %1061 = vrot.lane.b32.xlu0 %v930, 16
        %v1062 = vpop.permute.xlu0 %1061
        %1063 = vrot.lane.b32.xlu0 %v931, 16
        %v1064 = vpop.permute.xlu0 %1063
        %v1065 = vsel %vm969, %v1062, %v1064
        %v1068 = vsel %vm969, 0.0, %v1062
        %v1069 = vstv %s1060
        %v1070 = vmul.f32 %v1069, %v1068
        %v1071 = vmul.f32 %v1069, %v1065
        %v1072 = vadd.f32 %v1058, %v1070
        %v1073 = vadd.f32 %v1059, %v1071
        %s1074 = sld [smem:[#allocation6 + $0x49]]
        %v1075 = vstv %s1074
        %v1076 = vmul.f32 %v1075, %v930
        %v1077 = vmul.f32 %v1075, %v931
        %v1078 = vadd.f32 %v1072, %v1076
        %v1079 = vadd.f32 %v1073, %v1077
        %s1080 = sld [smem:[#allocation6 + $0x50]]
        %1081 = vrot.lane.b32.xlu0 %v930, 112
        %v1082 = vpop.permute.xlu0 %1081
        %1083 = vrot.lane.b32.xlu0 %v931, 112
        %v1084 = vpop.permute.xlu0 %1083
        %v1085 = vsel %vm990, %v1082, %v1084
        %v1088 = vsel %vm990, %v1084, 0.0
        %v1089 = vstv %s1080
        %v1090 = vmul.f32 %v1089, %v1085
        %v1091 = vmul.f32 %v1089, %v1088
        %v1092 = vadd.f32 %v1078, %v1090
        %v1093 = vadd.f32 %v1079, %v1091
        %s1094 = sld [smem:[#allocation6 + $0x57]]
        %1095 = vrot.lane.b32.xlu0 %v930, 96
        %v1096 = vpop.permute.xlu0 %1095
        %1097 = vrot.lane.b32.xlu0 %v931, 96
        %v1098 = vpop.permute.xlu0 %1097
        %v1099 = vsel %vm1005, %v1096, %v1098
        %v1102 = vsel %vm1005, %v1098, 0.0
        %v1103 = vstv %s1094
        %v1104 = vmul.f32 %v1103, %v1099
        %v1105 = vmul.f32 %v1103, %v1102
        %v1106 = vadd.f32 %v1092, %v1104
        %v1107 = vadd.f32 %v1093, %v1105
        %s1108 = sld [smem:[#allocation6 + $0x5e]]
        %1109 = vrot.lane.b32.xlu0 %v930, 80
        %v1110 = vpop.permute.xlu0 %1109
        %1111 = vrot.lane.b32.xlu0 %v931, 80
        %v1112 = vpop.permute.xlu0 %1111
        %v1113 = vsel %vm1020, %v1110, %v1112
        %v1116 = vsel %vm1020, %v1112, 0.0
        %v1117 = vstv %s1108
        %v1118 = vmul.f32 %v1117, %v1113
        %v1119 = vmul.f32 %v1117, %v1116
        %v1120 = vadd.f32 %v1106, %v1118
        %v1121 = vadd.f32 %v1107, %v1119
        %s1122 = scalar_lea.vmem [#allocation7], 4
        %v1123 = vld [vmem:[%s1122] ss:$8 sm:$0x3]
        %v1125 = vperm.slane %v1123, 0
        %v1126 = vperm.slane %v1123, 1
        %v1129 = vmul.f32 %v247, %v1125
        %v1130 = vmul.f32 %v248, %v1126
        %v1131 = vmul.f32 %v260, %v1125
        %v1132 = vmul.f32 %v267, %v1126
        %s1133 = sld [smem:[#allocation6 + $0x4]]
        %1136 = vrot.lane.b32.xlu0 %v1129, 47
        %v1137 = vpop.permute.xlu0 %1136
        %1138 = vrot.lane.b32.xlu0 %v1130, 47
        %v1139 = vpop.permute.xlu0 %1138
        %vm1140 = vcmask 384000
        %v1141 = vsel %vm1140, %v1137, %v1139
        %v1144 = vsel %vm1140, 0.0, %v1137
        %v1145 = vstv %s1133
        %v1146 = vmul.f32 %v1145, %v1144
        %v1147 = vmul.f32 %v1145, %v1141
        %v1148 = vadd.f32 %v1120, %v1146
        %v1149 = vadd.f32 %v1121, %v1147
        %s1150 = sld [smem:[#allocation6 + $0xb]]
        %1151 = vrot.lane.b32.xlu0 %v1129, 31
        %v1152 = vpop.permute.xlu0 %1151
        %1153 = vrot.lane.b32.xlu0 %v1130, 31
        %v1154 = vpop.permute.xlu0 %1153
        %vm1155 = vcmask 252928
        %v1156 = vsel %vm1155, %v1152, %v1154
        %v1159 = vsel %vm1155, 0.0, %v1152
        %v1160 = vstv %s1150
        %v1161 = vmul.f32 %v1160, %v1159
        %v1162 = vmul.f32 %v1160, %v1156
        %v1163 = vadd.f32 %v1148, %v1161
        %v1164 = vadd.f32 %v1149, %v1162
        %s1165 = sld [smem:[#allocation6 + $0x12]]
        %1166 = vrot.lane.b32.xlu0 %v1129, 15
        %v1167 = vpop.permute.xlu0 %1166
        %1168 = vrot.lane.b32.xlu0 %v1130, 15
        %v1169 = vpop.permute.xlu0 %1168
        %vm1170 = vcmask 121856
        %v1171 = vsel %vm1170, %v1167, %v1169
        %v1174 = vsel %vm1170, 0.0, %v1167
        %v1175 = vstv %s1165
        %v1176 = vmul.f32 %v1175, %v1174
        %v1177 = vmul.f32 %v1175, %v1171
        %v1178 = vadd.f32 %v1163, %v1176
        %v1179 = vadd.f32 %v1164, %v1177
        %s1180 = sld [smem:[#allocation6 + $0x19]]
        %1181 = vrot.lane.b32.xlu0 %v1129, 127
        %v1182 = vpop.permute.xlu0 %1181
        %1183 = vrot.lane.b32.xlu0 %v1130, 127
        %v1184 = vpop.permute.xlu0 %1183
        %vm1185 = vcmask 1039360
        %v1186 = vsel %vm1185, %v1182, %v1184
        %v1189 = vsel %vm1185, %v1184, 0.0
        %v1190 = vstv %s1180
        %v1191 = vmul.f32 %v1190, %v1186
        %v1192 = vmul.f32 %v1190, %v1189
        %v1193 = vadd.f32 %v1178, %v1191
        %v1194 = vadd.f32 %v1179, %v1192
        %s1195 = sld [smem:[#allocation6 + $0x20]]
        %1196 = vrot.lane.b32.xlu0 %v1129, 111
        %v1197 = vpop.permute.xlu0 %1196
        %1198 = vrot.lane.b32.xlu0 %v1130, 111
        %v1199 = vpop.permute.xlu0 %1198
        %vm1200 = vcmask 908288
        %v1201 = vsel %vm1200, %v1197, %v1199
        %v1204 = vsel %vm1200, %v1199, 0.0
        %v1205 = vstv %s1195
        %v1206 = vmul.f32 %v1205, %v1201
        %v1207 = vmul.f32 %v1205, %v1204
        %v1208 = vadd.f32 %v1193, %v1206
        %v1209 = vadd.f32 %v1194, %v1207
        %s1210 = sld [smem:[#allocation6 + $0x27]]
        %1211 = vrot.lane.b32.xlu0 %v1129, 95
        %v1212 = vpop.permute.xlu0 %1211
        %1213 = vrot.lane.b32.xlu0 %v1130, 95
        %v1214 = vpop.permute.xlu0 %1213
        %vm1215 = vcmask 777216
        %v1216 = vsel %vm1215, %v1212, %v1214
        %v1219 = vsel %vm1215, %v1214, 0.0
        %v1220 = vstv %s1210
        %v1221 = vmul.f32 %v1220, %v1216
        %v1222 = vmul.f32 %v1220, %v1219
        %v1223 = vadd.f32 %v1208, %v1221
        %v1224 = vadd.f32 %v1209, %v1222
        %s1225 = sld [smem:[#allocation6 + $0x2e]]
        %1226 = vrot.lane.b32.xlu0 %v1129, 79
        %v1227 = vpop.permute.xlu0 %1226
        %1228 = vrot.lane.b32.xlu0 %v1130, 79
        %v1229 = vpop.permute.xlu0 %1228
        %vm1230 = vcmask 646144
        %v1231 = vsel %vm1230, %v1227, %v1229
        %v1234 = vsel %vm1230, %v1229, 0.0
        %v1235 = vstv %s1225
        %v1236 = vmul.f32 %v1235, %v1231
        %v1237 = vmul.f32 %v1235, %v1234
        %v1238 = vadd.f32 %v1223, %v1236
        %v1239 = vadd.f32 %v1224, %v1237
        %s1240 = sld [smem:[#allocation6 + $0x35]]
        %1243 = vrot.lane.b32.xlu0 %v1131, 47
        %v1244 = vpop.permute.xlu0 %1243
        %1245 = vrot.lane.b32.xlu0 %v1132, 47
        %v1246 = vpop.permute.xlu0 %1245
        %v1247 = vsel %vm1140, %v1244, %v1246
        %v1250 = vsel %vm1140, 0.0, %v1244
        %v1251 = vstv %s1240
        %v1252 = vmul.f32 %v1251, %v1250
        %v1253 = vmul.f32 %v1251, %v1247
        %v1254 = vadd.f32 %v1238, %v1252
        %v1255 = vadd.f32 %v1239, %v1253
        %s1256 = sld [smem:[#allocation6 + $0x3c]]
        %1257 = vrot.lane.b32.xlu0 %v1131, 31
        %v1258 = vpop.permute.xlu0 %1257
        %1259 = vrot.lane.b32.xlu0 %v1132, 31
        %v1260 = vpop.permute.xlu0 %1259
        %v1261 = vsel %vm1155, %v1258, %v1260
        %v1264 = vsel %vm1155, 0.0, %v1258
        %v1265 = vstv %s1256
        %v1266 = vmul.f32 %v1265, %v1264
        %v1267 = vmul.f32 %v1265, %v1261
        %v1268 = vadd.f32 %v1254, %v1266
        %v1269 = vadd.f32 %v1255, %v1267
        %s1270 = sld [smem:[#allocation6 + $0x43]]
        %1271 = vrot.lane.b32.xlu0 %v1131, 15
        %v1272 = vpop.permute.xlu0 %1271
        %1273 = vrot.lane.b32.xlu0 %v1132, 15
        %v1274 = vpop.permute.xlu0 %1273
        %v1275 = vsel %vm1170, %v1272, %v1274
        %v1278 = vsel %vm1170, 0.0, %v1272
        %v1279 = vstv %s1270
        %v1280 = vmul.f32 %v1279, %v1278
        %v1281 = vmul.f32 %v1279, %v1275
        %v1282 = vadd.f32 %v1268, %v1280
        %v1283 = vadd.f32 %v1269, %v1281
        %s1284 = sld [smem:[#allocation6 + $0x4a]]
        %1285 = vrot.lane.b32.xlu0 %v1131, 127
        %v1286 = vpop.permute.xlu0 %1285
        %1287 = vrot.lane.b32.xlu0 %v1132, 127
        %v1288 = vpop.permute.xlu0 %1287
        %v1289 = vsel %vm1185, %v1286, %v1288
        %v1292 = vsel %vm1185, %v1288, 0.0
        %v1293 = vstv %s1284
        %v1294 = vmul.f32 %v1293, %v1289
        %v1295 = vmul.f32 %v1293, %v1292
        %v1296 = vadd.f32 %v1282, %v1294
        %v1297 = vadd.f32 %v1283, %v1295
        %s1298 = sld [smem:[#allocation6 + $0x51]]
        %1299 = vrot.lane.b32.xlu0 %v1131, 111
        %v1300 = vpop.permute.xlu0 %1299
        %1301 = vrot.lane.b32.xlu0 %v1132, 111
        %v1302 = vpop.permute.xlu0 %1301
        %v1303 = vsel %vm1200, %v1300, %v1302
        %v1306 = vsel %vm1200, %v1302, 0.0
        %v1307 = vstv %s1298
        %v1308 = vmul.f32 %v1307, %v1303
        %v1309 = vmul.f32 %v1307, %v1306
        %v1310 = vadd.f32 %v1296, %v1308
        %v1311 = vadd.f32 %v1297, %v1309
        %s1312 = sld [smem:[#allocation6 + $0x58]]
        %1313 = vrot.lane.b32.xlu0 %v1131, 95
        %v1314 = vpop.permute.xlu0 %1313
        %1315 = vrot.lane.b32.xlu0 %v1132, 95
        %v1316 = vpop.permute.xlu0 %1315
        %v1317 = vsel %vm1215, %v1314, %v1316
        %v1320 = vsel %vm1215, %v1316, 0.0
        %v1321 = vstv %s1312
        %v1322 = vmul.f32 %v1321, %v1317
        %v1323 = vmul.f32 %v1321, %v1320
        %v1324 = vadd.f32 %v1310, %v1322
        %v1325 = vadd.f32 %v1311, %v1323
        %s1326 = sld [smem:[#allocation6 + $0x5f]]
        %1327 = vrot.lane.b32.xlu0 %v1131, 79
        %v1328 = vpop.permute.xlu0 %1327
        %1329 = vrot.lane.b32.xlu0 %v1132, 79
        %v1330 = vpop.permute.xlu0 %1329
        %v1331 = vsel %vm1230, %v1328, %v1330
        %v1334 = vsel %vm1230, %v1330, 0.0
        %v1335 = vstv %s1326
        %v1336 = vmul.f32 %v1335, %v1331
        %v1337 = vmul.f32 %v1335, %v1334
        %v1338 = vadd.f32 %v1324, %v1336
        %v1339 = vadd.f32 %v1325, %v1337
        %s1340 = scalar_lea.vmem [#allocation7], 5
        %v1341 = vld [vmem:[%s1340] ss:$8 sm:$0x3]
        %v1343 = vperm.slane %v1341, 0
        %v1344 = vperm.slane %v1341, 1
        %v1347 = vmul.f32 %v247, %v1343
        %v1348 = vmul.f32 %v248, %v1344
        %v1349 = vmul.f32 %v260, %v1343
        %v1350 = vmul.f32 %v267, %v1344
        %s1351 = sld [smem:[#allocation6 + $0x5]]
        %1354 = vrot.lane.b32.xlu0 %v1347, 46
        %v1355 = vpop.permute.xlu0 %1354
        %1356 = vrot.lane.b32.xlu0 %v1348, 46
        %v1357 = vpop.permute.xlu0 %1356
        %vm1358 = vcmask 375808
        %v1359 = vsel %vm1358, %v1355, %v1357
        %v1362 = vsel %vm1358, 0.0, %v1355
        %v1363 = vstv %s1351
        %v1364 = vmul.f32 %v1363, %v1362
        %v1365 = vmul.f32 %v1363, %v1359
        %v1366 = vadd.f32 %v1338, %v1364
        %v1367 = vadd.f32 %v1339, %v1365
        %s1368 = sld [smem:[#allocation6 + $0xc]]
        %1369 = vrot.lane.b32.xlu0 %v1347, 30
        %v1370 = vpop.permute.xlu0 %1369
        %1371 = vrot.lane.b32.xlu0 %v1348, 30
        %v1372 = vpop.permute.xlu0 %1371
        %vm1373 = vcmask 244736
        %v1374 = vsel %vm1373, %v1370, %v1372
        %v1377 = vsel %vm1373, 0.0, %v1370
        %v1378 = vstv %s1368
        %v1379 = vmul.f32 %v1378, %v1377
        %v1380 = vmul.f32 %v1378, %v1374
        %v1381 = vadd.f32 %v1366, %v1379
        %v1382 = vadd.f32 %v1367, %v1380
        %s1383 = sld [smem:[#allocation6 + $0x13]]
        %1384 = vrot.lane.b32.xlu0 %v1347, 14
        %v1385 = vpop.permute.xlu0 %1384
        %1386 = vrot.lane.b32.xlu0 %v1348, 14
        %v1387 = vpop.permute.xlu0 %1386
        %vm1388 = vcmask 113664
        %v1389 = vsel %vm1388, %v1385, %v1387
        %v1392 = vsel %vm1388, 0.0, %v1385
        %v1393 = vstv %s1383
        %v1394 = vmul.f32 %v1393, %v1392
        %v1395 = vmul.f32 %v1393, %v1389
        %v1396 = vadd.f32 %v1381, %v1394
        %v1397 = vadd.f32 %v1382, %v1395
        %s1398 = sld [smem:[#allocation6 + $0x1a]]
        %1399 = vrot.lane.b32.xlu0 %v1347, 126
        %v1400 = vpop.permute.xlu0 %1399
        %1401 = vrot.lane.b32.xlu0 %v1348, 126
        %v1402 = vpop.permute.xlu0 %1401
        %vm1403 = vcmask 1031168
        %v1404 = vsel %vm1403, %v1400, %v1402
        %v1407 = vsel %vm1403, %v1402, 0.0
        %v1408 = vstv %s1398
        %v1409 = vmul.f32 %v1408, %v1404
        %v1410 = vmul.f32 %v1408, %v1407
        %v1411 = vadd.f32 %v1396, %v1409
        %v1412 = vadd.f32 %v1397, %v1410
        %s1413 = sld [smem:[#allocation6 + $0x21]]
        %1414 = vrot.lane.b32.xlu0 %v1347, 110
        %v1415 = vpop.permute.xlu0 %1414
        %1416 = vrot.lane.b32.xlu0 %v1348, 110
        %v1417 = vpop.permute.xlu0 %1416
        %vm1418 = vcmask 900096
        %v1419 = vsel %vm1418, %v1415, %v1417
        %v1422 = vsel %vm1418, %v1417, 0.0
        %v1423 = vstv %s1413
        %v1424 = vmul.f32 %v1423, %v1419
        %v1425 = vmul.f32 %v1423, %v1422
        %v1426 = vadd.f32 %v1411, %v1424
        %v1427 = vadd.f32 %v1412, %v1425
        %s1428 = sld [smem:[#allocation6 + $0x28]]
        %1429 = vrot.lane.b32.xlu0 %v1347, 94
        %v1430 = vpop.permute.xlu0 %1429
        %1431 = vrot.lane.b32.xlu0 %v1348, 94
        %v1432 = vpop.permute.xlu0 %1431
        %vm1433 = vcmask 769024
        %v1434 = vsel %vm1433, %v1430, %v1432
        %v1437 = vsel %vm1433, %v1432, 0.0
        %v1438 = vstv %s1428
        %v1439 = vmul.f32 %v1438, %v1434
        %v1440 = vmul.f32 %v1438, %v1437
        %v1441 = vadd.f32 %v1426, %v1439
        %v1442 = vadd.f32 %v1427, %v1440
        %s1443 = sld [smem:[#allocation6 + $0x2f]]
        %1444 = vrot.lane.b32.xlu0 %v1347, 78
        %v1445 = vpop.permute.xlu0 %1444
        %1446 = vrot.lane.b32.xlu0 %v1348, 78
        %v1447 = vpop.permute.xlu0 %1446
        %vm1448 = vcmask 637952
        %v1449 = vsel %vm1448, %v1445, %v1447
        %v1452 = vsel %vm1448, %v1447, 0.0
        %v1453 = vstv %s1443
        %v1454 = vmul.f32 %v1453, %v1449
        %v1455 = vmul.f32 %v1453, %v1452
        %v1456 = vadd.f32 %v1441, %v1454
        %v1457 = vadd.f32 %v1442, %v1455
        %s1458 = sld [smem:[#allocation6 + $0x36]]
        %1461 = vrot.lane.b32.xlu0 %v1349, 46
        %v1462 = vpop.permute.xlu0 %1461
        %1463 = vrot.lane.b32.xlu0 %v1350, 46
        %v1464 = vpop.permute.xlu0 %1463
        %v1465 = vsel %vm1358, %v1462, %v1464
        %v1468 = vsel %vm1358, 0.0, %v1462
        %v1469 = vstv %s1458
        %v1470 = vmul.f32 %v1469, %v1468
        %v1471 = vmul.f32 %v1469, %v1465
        %v1472 = vadd.f32 %v1456, %v1470
        %v1473 = vadd.f32 %v1457, %v1471
        %s1474 = sld [smem:[#allocation6 + $0x3d]]
        %1475 = vrot.lane.b32.xlu0 %v1349, 30
        %v1476 = vpop.permute.xlu0 %1475
        %1477 = vrot.lane.b32.xlu0 %v1350, 30
        %v1478 = vpop.permute.xlu0 %1477
        %v1479 = vsel %vm1373, %v1476, %v1478
        %v1482 = vsel %vm1373, 0.0, %v1476
        %v1483 = vstv %s1474
        %v1484 = vmul.f32 %v1483, %v1482
        %v1485 = vmul.f32 %v1483, %v1479
        %v1486 = vadd.f32 %v1472, %v1484
        %v1487 = vadd.f32 %v1473, %v1485
        %s1488 = sld [smem:[#allocation6 + $0x44]]
        %1489 = vrot.lane.b32.xlu0 %v1349, 14
        %v1490 = vpop.permute.xlu0 %1489
        %1491 = vrot.lane.b32.xlu0 %v1350, 14
        %v1492 = vpop.permute.xlu0 %1491
        %v1493 = vsel %vm1388, %v1490, %v1492
        %v1496 = vsel %vm1388, 0.0, %v1490
        %v1497 = vstv %s1488
        %v1498 = vmul.f32 %v1497, %v1496
        %v1499 = vmul.f32 %v1497, %v1493
        %v1500 = vadd.f32 %v1486, %v1498
        %v1501 = vadd.f32 %v1487, %v1499
        %s1502 = sld [smem:[#allocation6 + $0x4b]]
        %1503 = vrot.lane.b32.xlu0 %v1349, 126
        %v1504 = vpop.permute.xlu0 %1503
        %1505 = vrot.lane.b32.xlu0 %v1350, 126
        %v1506 = vpop.permute.xlu0 %1505
        %v1507 = vsel %vm1403, %v1504, %v1506
        %v1510 = vsel %vm1403, %v1506, 0.0
        %v1511 = vstv %s1502
        %v1512 = vmul.f32 %v1511, %v1507
        %v1513 = vmul.f32 %v1511, %v1510
        %v1514 = vadd.f32 %v1500, %v1512
        %v1515 = vadd.f32 %v1501, %v1513
        %s1516 = sld [smem:[#allocation6 + $0x52]]
        %1517 = vrot.lane.b32.xlu0 %v1349, 110
        %v1518 = vpop.permute.xlu0 %1517
        %1519 = vrot.lane.b32.xlu0 %v1350, 110
        %v1520 = vpop.permute.xlu0 %1519
        %v1521 = vsel %vm1418, %v1518, %v1520
        %v1524 = vsel %vm1418, %v1520, 0.0
        %v1525 = vstv %s1516
        %v1526 = vmul.f32 %v1525, %v1521
        %v1527 = vmul.f32 %v1525, %v1524
        %v1528 = vadd.f32 %v1514, %v1526
        %v1529 = vadd.f32 %v1515, %v1527
        %s1530 = sld [smem:[#allocation6 + $0x59]]
        %1531 = vrot.lane.b32.xlu0 %v1349, 94
        %v1532 = vpop.permute.xlu0 %1531
        %1533 = vrot.lane.b32.xlu0 %v1350, 94
        %v1534 = vpop.permute.xlu0 %1533
        %v1535 = vsel %vm1433, %v1532, %v1534
        %v1538 = vsel %vm1433, %v1534, 0.0
        %v1539 = vstv %s1530
        %v1540 = vmul.f32 %v1539, %v1535
        %v1541 = vmul.f32 %v1539, %v1538
        %v1542 = vadd.f32 %v1528, %v1540
        %v1543 = vadd.f32 %v1529, %v1541
        %s1544 = sld [smem:[#allocation6 + $0x60]]
        %1545 = vrot.lane.b32.xlu0 %v1349, 78
        %v1546 = vpop.permute.xlu0 %1545
        %1547 = vrot.lane.b32.xlu0 %v1350, 78
        %v1548 = vpop.permute.xlu0 %1547
        %v1549 = vsel %vm1448, %v1546, %v1548
        %v1552 = vsel %vm1448, %v1548, 0.0
        %v1553 = vstv %s1544
        %v1554 = vmul.f32 %v1553, %v1549
        %v1555 = vmul.f32 %v1553, %v1552
        %v1556 = vadd.f32 %v1542, %v1554
        %v1557 = vadd.f32 %v1543, %v1555
        %s1558 = scalar_lea.vmem [#allocation7], 6
        %v1559 = vld [vmem:[%s1558] ss:$8 sm:$0x3]
        %v1561 = vperm.slane %v1559, 0
        %v1562 = vperm.slane %v1559, 1
        %v1565 = vmul.f32 %v247, %v1561
        %v1566 = vmul.f32 %v248, %v1562
        %v1567 = vmul.f32 %v260, %v1561
        %v1568 = vmul.f32 %v267, %v1562
        %s1569 = sld [smem:[#allocation6 + $0x6]]
        %1572 = vrot.lane.b32.xlu0 %v1565, 45
        %v1573 = vpop.permute.xlu0 %1572
        %1574 = vrot.lane.b32.xlu0 %v1566, 45
        %v1575 = vpop.permute.xlu0 %1574
        %vm1576 = vcmask 367616
        %v1577 = vsel %vm1576, %v1573, %v1575
        %v1580 = vsel %vm1576, 0.0, %v1573
        %v1581 = vstv %s1569
        %v1582 = vmul.f32 %v1581, %v1580
        %v1583 = vmul.f32 %v1581, %v1577
        %v1584 = vadd.f32 %v1556, %v1582
        %v1585 = vadd.f32 %v1557, %v1583
        %s1586 = sld [smem:[#allocation6 + $0xd]]
        %1587 = vrot.lane.b32.xlu0 %v1565, 29
        %v1588 = vpop.permute.xlu0 %1587
        %1589 = vrot.lane.b32.xlu0 %v1566, 29
        %v1590 = vpop.permute.xlu0 %1589
        %vm1591 = vcmask 236544
        %v1592 = vsel %vm1591, %v1588, %v1590
        %v1595 = vsel %vm1591, 0.0, %v1588
        %v1596 = vstv %s1586
        %v1597 = vmul.f32 %v1596, %v1595
        %v1598 = vmul.f32 %v1596, %v1592
        %v1599 = vadd.f32 %v1584, %v1597
        %v1600 = vadd.f32 %v1585, %v1598
        %s1601 = sld [smem:[#allocation6 + $0x14]]
        %1602 = vrot.lane.b32.xlu0 %v1565, 13
        %v1603 = vpop.permute.xlu0 %1602
        %1604 = vrot.lane.b32.xlu0 %v1566, 13
        %v1605 = vpop.permute.xlu0 %1604
        %vm1606 = vcmask 105472
        %v1607 = vsel %vm1606, %v1603, %v1605
        %v1610 = vsel %vm1606, 0.0, %v1603
        %v1611 = vstv %s1601
        %v1612 = vmul.f32 %v1611, %v1610
        %v1613 = vmul.f32 %v1611, %v1607
        %v1614 = vadd.f32 %v1599, %v1612
        %v1615 = vadd.f32 %v1600, %v1613
        %s1616 = sld [smem:[#allocation6 + $0x1b]]
        %1617 = vrot.lane.b32.xlu0 %v1565, 125
        %v1618 = vpop.permute.xlu0 %1617
        %1619 = vrot.lane.b32.xlu0 %v1566, 125
        %v1620 = vpop.permute.xlu0 %1619
        %vm1621 = vcmask 1022976
        %v1622 = vsel %vm1621, %v1618, %v1620
        %v1625 = vsel %vm1621, %v1620, 0.0
        %v1626 = vstv %s1616
        %v1627 = vmul.f32 %v1626, %v1622
        %v1628 = vmul.f32 %v1626, %v1625
        %v1629 = vadd.f32 %v1614, %v1627
        %v1630 = vadd.f32 %v1615, %v1628
        %s1631 = sld [smem:[#allocation6 + $0x22]]
        %1632 = vrot.lane.b32.xlu0 %v1565, 109
        %v1633 = vpop.permute.xlu0 %1632
        %1634 = vrot.lane.b32.xlu0 %v1566, 109
        %v1635 = vpop.permute.xlu0 %1634
        %vm1636 = vcmask 891904
        %v1637 = vsel %vm1636, %v1633, %v1635
        %v1640 = vsel %vm1636, %v1635, 0.0
        %v1641 = vstv %s1631
        %v1642 = vmul.f32 %v1641, %v1637
        %v1643 = vmul.f32 %v1641, %v1640
        %v1644 = vadd.f32 %v1629, %v1642
        %v1645 = vadd.f32 %v1630, %v1643
        %s1646 = sld [smem:[#allocation6 + $0x29]]
        %1647 = vrot.lane.b32.xlu0 %v1565, 93
        %v1648 = vpop.permute.xlu0 %1647
        %1649 = vrot.lane.b32.xlu0 %v1566, 93
        %v1650 = vpop.permute.xlu0 %1649
        %vm1651 = vcmask 760832
        %v1652 = vsel %vm1651, %v1648, %v1650
        %v1655 = vsel %vm1651, %v1650, 0.0
        %v1656 = vstv %s1646
        %v1657 = vmul.f32 %v1656, %v1652
        %v1658 = vmul.f32 %v1656, %v1655
        %v1659 = vadd.f32 %v1644, %v1657
        %v1660 = vadd.f32 %v1645, %v1658
        %s1661 = sld [smem:[#allocation6 + $0x30]]
        %1662 = vrot.lane.b32.xlu0 %v1565, 77
        %v1663 = vpop.permute.xlu0 %1662
        %1664 = vrot.lane.b32.xlu0 %v1566, 77
        %v1665 = vpop.permute.xlu0 %1664
        %vm1666 = vcmask 629760
        %v1667 = vsel %vm1666, %v1663, %v1665
        %v1670 = vsel %vm1666, %v1665, 0.0
        %v1671 = vstv %s1661
        %v1672 = vmul.f32 %v1671, %v1667
        %v1673 = vmul.f32 %v1671, %v1670
        %v1674 = vadd.f32 %v1659, %v1672
        %v1675 = vadd.f32 %v1660, %v1673
        %s1676 = sld [smem:[#allocation6 + $0x37]]
        %1679 = vrot.lane.b32.xlu0 %v1567, 45
        %v1680 = vpop.permute.xlu0 %1679
        %1681 = vrot.lane.b32.xlu0 %v1568, 45
        %v1682 = vpop.permute.xlu0 %1681
        %v1683 = vsel %vm1576, %v1680, %v1682
        %v1686 = vsel %vm1576, 0.0, %v1680
        %v1687 = vstv %s1676
        %v1688 = vmul.f32 %v1687, %v1686
        %v1689 = vmul.f32 %v1687, %v1683
        %v1690 = vadd.f32 %v1674, %v1688
        %v1691 = vadd.f32 %v1675, %v1689
        %s1692 = sld [smem:[#allocation6 + $0x3e]]
        %1693 = vrot.lane.b32.xlu0 %v1567, 29
        %v1694 = vpop.permute.xlu0 %1693
        %1695 = vrot.lane.b32.xlu0 %v1568, 29
        %v1696 = vpop.permute.xlu0 %1695
        %v1697 = vsel %vm1591, %v1694, %v1696
        %v1700 = vsel %vm1591, 0.0, %v1694
        %v1701 = vstv %s1692
        %v1702 = vmul.f32 %v1701, %v1700
        %v1703 = vmul.f32 %v1701, %v1697
        %v1704 = vadd.f32 %v1690, %v1702
        %v1705 = vadd.f32 %v1691, %v1703
        %s1706 = sld [smem:[#allocation6 + $0x45]]
        %1707 = vrot.lane.b32.xlu0 %v1567, 13
        %v1708 = vpop.permute.xlu0 %1707
        %1709 = vrot.lane.b32.xlu0 %v1568, 13
        %v1710 = vpop.permute.xlu0 %1709
        %v1711 = vsel %vm1606, %v1708, %v1710
        %v1714 = vsel %vm1606, 0.0, %v1708
        %v1715 = vstv %s1706
        %v1716 = vmul.f32 %v1715, %v1714
        %v1717 = vmul.f32 %v1715, %v1711
        %v1718 = vadd.f32 %v1704, %v1716
        %v1719 = vadd.f32 %v1705, %v1717
        %s1720 = sld [smem:[#allocation6 + $0x4c]]
        %1721 = vrot.lane.b32.xlu0 %v1567, 125
        %v1722 = vpop.permute.xlu0 %1721
        %1723 = vrot.lane.b32.xlu0 %v1568, 125
        %v1724 = vpop.permute.xlu0 %1723
        %v1725 = vsel %vm1621, %v1722, %v1724
        %v1728 = vsel %vm1621, %v1724, 0.0
        %v1729 = vstv %s1720
        %v1730 = vmul.f32 %v1729, %v1725
        %v1731 = vmul.f32 %v1729, %v1728
        %v1732 = vadd.f32 %v1718, %v1730
        %v1733 = vadd.f32 %v1719, %v1731
        %s1734 = sld [smem:[#allocation6 + $0x53]]
        %1735 = vrot.lane.b32.xlu0 %v1567, 109
        %v1736 = vpop.permute.xlu0 %1735
        %1737 = vrot.lane.b32.xlu0 %v1568, 109
        %v1738 = vpop.permute.xlu0 %1737
        %v1739 = vsel %vm1636, %v1736, %v1738
        %v1742 = vsel %vm1636, %v1738, 0.0
        %v1743 = vstv %s1734
        %v1744 = vmul.f32 %v1743, %v1739
        %v1745 = vmul.f32 %v1743, %v1742
        %v1746 = vadd.f32 %v1732, %v1744
        %v1747 = vadd.f32 %v1733, %v1745
        %s1748 = sld [smem:[#allocation6 + $0x5a]]
        %1749 = vrot.lane.b32.xlu0 %v1567, 93
        %v1750 = vpop.permute.xlu0 %1749
        %1751 = vrot.lane.b32.xlu0 %v1568, 93
        %v1752 = vpop.permute.xlu0 %1751
        %v1753 = vsel %vm1651, %v1750, %v1752
        %v1756 = vsel %vm1651, %v1752, 0.0
        %v1757 = vstv %s1748
        %v1758 = vmul.f32 %v1757, %v1753
        %v1759 = vmul.f32 %v1757, %v1756
        %v1760 = vadd.f32 %v1746, %v1758
        %v1761 = vadd.f32 %v1747, %v1759
        %s1762 = sld [smem:[#allocation6 + $0x61]]
        %1763 = vrot.lane.b32.xlu0 %v1567, 77
        %v1764 = vpop.permute.xlu0 %1763
        %1765 = vrot.lane.b32.xlu0 %v1568, 77
        %v1766 = vpop.permute.xlu0 %1765
        %v1767 = vsel %vm1666, %v1764, %v1766
        %v1770 = vsel %vm1666, %v1766, 0.0
        %v1771 = vstv %s1762
        %v1772 = vmul.f32 %v1771, %v1767
        %v1773 = vmul.f32 %v1771, %v1770
        %v1774 = vadd.f32 %v1760, %v1772
        %v1775 = vadd.f32 %v1761, %v1773
        %v1776 = vxor.u32 %v1774, 2147483648
        %v1777 = vxor.u32 %v1775, 2147483648
        %v1778 = vmul.f32 %v1776, 1.442695
        %v1779 = vpow.pop %v1778
        %v1780 = vmul.f32 %v1777, 1.442695
        %v1781 = vpow.pop %v1780
        %v1782 = vadd.f32 %v1779, 1.0
        %v1783 = vadd.f32 %v1781, 1.0
        %v1784 = vrcp.pop %v1782
        %v1785 = vmul.f32 %v1782, %v1784
        %v1786 = vsub.f32 1.0, %v1785
        %v1787 = vmul.f32 %v1784, %v1786
        %v1788 = vadd.f32 %v1784, %v1787
        %vm1789 = vweird.f32 %v1782
        %vm1790 = vweird.f32 %v1784
        %vm1791 = vmor %vm1789, %vm1790
        %v1792 = vsel %vm1791, %v1784, %v1788
        %v1793 = vand.u32 2147483647, %v1782
        %vm1794 = vcmp.eq.f32.partialorder %v1793, 8.507059e+37
        %v1795 = vand.u32 %v1782, 2147483648
        %v1796 = vor.u32 1.1754944e-38, %v1795
        %v1797 = vsel %vm1794, %v1796, %v1792
        %v1798 = vmul.f32 1.0, %v1797
        %v1799 = vrcp.pop %v1783
        %v1800 = vmul.f32 %v1783, %v1799
        %v1801 = vsub.f32 1.0, %v1800
        %v1802 = vmul.f32 %v1799, %v1801
        %v1803 = vadd.f32 %v1799, %v1802
        %vm1804 = vweird.f32 %v1783
        %vm1805 = vweird.f32 %v1799
        %vm1806 = vmor %vm1804, %vm1805
        %v1807 = vsel %vm1806, %v1799, %v1803
        %v1808 = vand.u32 2147483647, %v1783
        %vm1809 = vcmp.eq.f32.partialorder %v1808, 8.507059e+37
        %v1810 = vand.u32 %v1783, 2147483648
        %v1811 = vor.u32 1.1754944e-38, %v1810
        %v1812 = vsel %vm1809, %v1811, %v1807
        %v1813 = vmul.f32 1.0, %v1812
        %v1816 = vrot.slane %v1813, 7
        %vm1817 = vcmask 1040384
        %v1818 = vsel %vm1817, %v1798, %v1816
        %v1820 = vlaneseq
        %vm1821 = vcmp.ge.s32.totalorder %v1820, 0
        %vm1822 = vcmp.lt.s32.totalorder %v1820, 256
        %vm1823 = vmand %vm1821, %vm1822
        %1824 = vst.msk [vmem:[%s217] sm:$0x3] %vm1823, %v1818
        %s1825 = sand.u32 %s98, 1
        %s1826 = scalar_lea.sflag [#allocation4], %s1825
        %s1827 = sand.u32 %s98, 1
        %s1828 = smul.addr %s1827, 2
        %s1829 = scalar_lea.vmem [#allocation9], %s1828
        // Predicated region
        $region45: #{tpu_custom_call.1} parent=31 // pred_check
          %p1830 = pneg %p108
        $region46: #{tpu_custom_call.1} parent=31 // pred_check_branch
          %1832 = sbr.rel (%p1830) target = $region48
        $region47: #{tpu_custom_call.1} parent=31 // pred_region
          %1834 = vsyncadd %s1826, 0
          %s1835 = smul.addr %s22, 2
          %s1836 = scalar_lea.hbm %s3, %s1835
          %s1838 = sshll.u32 %s1829, 4
          %s1839 = int_to_ptr.vmem [resolvable:$true] %s1838
          %s1840 = sshll.u32 %s1836, 4
          %s1841 = int_to_ptr.hbm [resolvable:$true] %s1840
          %1843 = dma.vmem_to_hbm [thread:$0]  %s1839, 32, %s1841, %s1826
        $region48: #{tpu_custom_call.1} parent=31 // pred_fallthru
          _
      $region32: #{tpu_custom_call.1} parent=5 // pred_fallthru
        _
      %p1844 = scmp.le.s32.totalorder 2, %s17
      // Predicated region
      $region49: #{tpu_custom_call.1} parent=5 // pred_check
        %p1845 = pneg %p1844
      $region50: #{tpu_custom_call.1} parent=5 // pred_check_branch
        %1847 = sbr.rel (%p1845) target = $region52
      $region51: #{tpu_custom_call.1} parent=5 // pred_region
        %s1848 = ssub.s32 %s17, 2
        // Predicated region
        $region53: #{tpu_custom_call.1} parent=51 // pred_check
          %p1849 = pneg %p114
        $region54: #{tpu_custom_call.1} parent=51 // pred_check_branch
          %1851 = sbr.rel (%p1849) target = $region56
        $region55: #{tpu_custom_call.1} parent=51 // pred_region
          %s1852 = sand.u32 %s99, 1
          %s1853 = scalar_lea.sflag [#allocation4], %s1852
          %s1854 = sand.u32 %s99, 1
          %s1855 = smul.addr %s1854, 2
          %s1856 = scalar_lea.vmem [#allocation9], %s1855
          %1858 = dma.done %s1853, 32
        $region56: #{tpu_custom_call.1} parent=51 // pred_fallthru
          _
      $region52: #{tpu_custom_call.1} parent=5 // pred_fallthru
        _
    $region6: #{tpu_custom_call.1} parent=1 // loop_footer
      %s21 = sadd.s32 1, %s17
    $region7: #{tpu_custom_call.1} parent=1 // loop_footer_branch
      %16 = sbr.rel target = $region3
    $region8: #{tpu_custom_call.1} parent=1 // loop_exit
      _
    %1859 = vsyncpa [#allocation3], 1
    %s1860 = scalar_lea.sflag [#allocation3], 1
    %1861 = vsyncpa %s1860, 1
    %1862 = vsyncpa [#allocation8], 1
    %1863 = vsyncpa [#allocation4], 1
    %s1864 = scalar_lea.sflag [#allocation4], 1
    %1865 = vsyncpa %s1864, 1
    %1866 = vsyncpa [#allocation5], 1
    %s1867 = scalar_lea.sflag [#allocation5], 1
    %1868 = vsyncpa %s1867, 1

</llo_original>
